<compile_context>
chip_gen: v7x
topology: tpu7x:2x2x1
jax: 0.10.0
libtpu: 0.0.40
codegen_flags: <defaults>
</compile_context>

<pallas_src>
import functools
import math

import jax
import jax.numpy as jnp
from jax.experimental import pallas as pl
from jax.experimental.pallas import tpu as pltpu


# ----------------------------------------------------------------------------
# Kernel
# ----------------------------------------------------------------------------
def _layernorm(x, gamma, beta, eps):
    mu = jnp.mean(x, axis=-1, keepdims=True)
    var = jnp.mean((x - mu) ** 2, axis=-1, keepdims=True)
    return (x - mu) * jax.lax.rsqrt(var + eps) * gamma + beta


def decoder_kernel(x_ref,
                   n1g_ref, n1b_ref,
                   wq_ref, bq_ref, wk_ref, bk_ref, wv_ref, bv_ref,
                   wproj_ref, bproj_ref,
                   n2g_ref, n2b_ref,
                   wfc1_ref, bfc1_ref, wfc2_ref, bfc2_ref,
                   fng_ref, fnb_ref,
                   out_ref,
                   x_acc,
                   *, num_heads, n_valid, block_eps, final_eps):
    l = pl.program_id(1)
    n_layers = pl.num_programs(1)

    # Layer 0: load the batch tile into the resident f32 carry.
    @pl.when(l == 0)
    def _():
        x_acc[...] = x_ref[...].astype(jnp.float32)

    x = x_acc[...]                                   # (Bt, Np, D) f32
    Bt, Np, D = x.shape
    rows = Bt * Np
    nh = num_heads
    hd = D // nh

    # Additive key-padding mask (static; only built when N was padded to Np).
    if n_valid < Np:
        col = jax.lax.broadcasted_iota(jnp.int32, (1, 1, Np), 2)
        key_mask = jnp.where(col < n_valid, 0.0, -1e30).astype(jnp.float32)
    else:
        key_mask = None

    # ---------------- Attention branch: x + proj(attn(LN1(x))) ---------------
    xn = _layernorm(x, n1g_ref[0], n1b_ref[0], block_eps)        # (Bt, Np, D)
    xn2 = xn.reshape(rows, D).astype(jnp.bfloat16)
    # Separate Q/K/V matmuls (full MXU output width).  The softmax scale is
    # folded into w_q / b_q by the wrapper, so no in-kernel scale multiply.
    q = jnp.dot(xn2, wq_ref[0], preferred_element_type=jnp.float32) + bq_ref[0]
    k = jnp.dot(xn2, wk_ref[0], preferred_element_type=jnp.float32) + bk_ref[0]
    v = jnp.dot(xn2, wv_ref[0], preferred_element_type=jnp.float32) + bv_ref[0]
    q = q.reshape(Bt, Np, D)
    k = k.reshape(Bt, Np, D)
    v = v.reshape(Bt, Np, D)

    head_outs = []
    for h in range(nh):               # static unroll; each head batched on Bt
        sl = slice(h * hd, (h + 1) * hd)
        qh = q[:, :, sl].astype(jnp.bfloat16)        # (Bt, Np, hd)
        kh = k[:, :, sl].astype(jnp.bfloat16)
        vh = v[:, :, sl].astype(jnp.bfloat16)
        s = jnp.einsum('bqd,bkd->bqk', qh, kh,
                       preferred_element_type=jnp.float32)       # (Bt, Np, Np)
        if key_mask is not None:
            s = s + key_mask
        s = s - jnp.max(s, axis=-1, keepdims=True)
        p = jnp.exp(s)
        p = p * pl.reciprocal(jnp.sum(p, axis=-1, keepdims=True), approx=True)
        oh = jnp.einsum('bqk,bkd->bqd', p.astype(jnp.bfloat16), vh,
                        preferred_element_type=jnp.float32)      # (Bt, Np, hd)
        head_outs.append(oh.reshape(rows, hd))
    attn = head_outs[0] if nh == 1 else jnp.concatenate(head_outs, axis=-1)

    proj = jnp.dot(attn.astype(jnp.bfloat16), wproj_ref[0],
                   preferred_element_type=jnp.float32) + bproj_ref[0]
    x = x + proj.reshape(Bt, Np, D)

    # ---------------- MLP branch: x + fc2(GELU(fc1(LN2(x)))) -----------------
    xn = _layernorm(x, n2g_ref[0], n2b_ref[0], block_eps)
    xn2 = xn.reshape(rows, D).astype(jnp.bfloat16)
    h1 = jnp.dot(xn2, wfc1_ref[0],
                 preferred_element_type=jnp.float32) + bfc1_ref[0]   # (rows,H)
    # exact (erf) GELU, matching nn.GELU(approximate='none'); cast to bf16
    # immediately so the large (rows, H) f32 temp dies before the fc2 dot.
    h1 = (0.5 * h1 * (1.0 + jax.lax.erf(h1 * (1.0 / math.sqrt(2.0))))
          ).astype(jnp.bfloat16)
    h2 = jnp.dot(h1, wfc2_ref[0],
                 preferred_element_type=jnp.float32) + bfc2_ref[0]   # (rows,D)
    x = x + h2.reshape(Bt, Np, D)

    # carry to next layer step
    x_acc[...] = x

    # Last layer: fused final LayerNorm + writeback of the batch tile.
    @pl.when(l == n_layers - 1)
    def _():
        y = _layernorm(x, fng_ref[...], fnb_ref[...], final_eps)
        out_ref[...] = y.astype(out_ref.dtype)


# ----------------------------------------------------------------------------
# Wrapper
# ----------------------------------------------------------------------------
def _pick_batch_tile(B, Np, target_rows=1024, min_tiles=2):
    """Largest divisor Bt of B with Bt*Np <= target_rows, preferring tilings
    that leave >= min_tiles batch tiles (v7x megacore sharding)."""
    divisors = [bt for bt in range(1, B + 1) if B % bt == 0]
    fit = [bt for bt in divisors if bt * Np <= target_rows] or [1]
    multi = [bt for bt in fit if B // bt >= min_tiles]
    return max(multi) if multi else max(fit)


def _default_vmem_limit_bytes():
    """~80% of physical per-core VMEM; conservative 48 MiB fallback (safe on
    v7x's 64 MiB parts, still a raise vs. the default scoped limit)."""
    try:
        cap = int(pltpu.get_tpu_info().vmem_capacity_bytes)
        return int(cap * 0.8)
    except Exception:
        return 48 * 1024 * 1024


def mae_decoder_forward(x, params, *, num_heads, block_eps, final_eps,
                        batch_tile=None, target_rows=1024,
                        vmem_limit_bytes=None):
    B, N, D = x.shape
    assert D % num_heads == 0
    L = params["w_q"].shape[0]
    H = params["w_fc1"].shape[-1]

    # Pad tokens to a sublane multiple so (Bt,Np,D) <-> (rows,D) reshapes are
    # tile-aligned.  Padded key columns are masked out in the kernel softmax;
    # padded query rows are sliced off below.
    Np = ((N + 7) // 8) * 8
    if Np != N:
        x = jnp.pad(x, ((0, 0), (0, Np - N), (0, 0)))

    Bt = batch_tile if batch_tile is not None else _pick_batch_tile(B, Np, target_rows)
    assert B % Bt == 0
    if vmem_limit_bytes is None:
        vmem_limit_bytes = _default_vmem_limit_bytes()

    def wspec(shape):
        nd = len(shape)
        # stacked per-layer tensor (L, *shape): stream layer l each grid step
        return pl.BlockSpec((1,) + tuple(shape),
                            lambda b, l, _nd=nd: (l,) + (0,) * _nd)

    weights = [params["n1_g"], params["n1_b"],
               params["w_q"], params["b_q"],
               params["w_k"], params["b_k"],
               params["w_v"], params["b_v"],
               params["w_proj"], params["b_proj"],
               params["n2_g"], params["n2_b"],
               params["w_fc1"], params["b_fc1"],
               params["w_fc2"], params["b_fc2"]]

    in_specs = [pl.BlockSpec((Bt, Np, D), lambda b, l: (b, 0, 0))]
    in_specs += [wspec(w.shape[1:]) for w in weights]
    in_specs += [pl.BlockSpec((1, D), lambda b, l: (0, 0)),   # final norm gamma
                 pl.BlockSpec((1, D), lambda b, l: (0, 0))]   # final norm beta

    # Advisory cost estimate (helps XLA schedule around the long fused call).
    rows_total = B * Np
    flops = int(L * (2 * rows_total * D * (4 * D + 2 * H)
                     + 4 * rows_total * Np * D))
    transcendentals = int(L * (rows_total * H + rows_total * Np * num_heads))
    weight_bytes = sum(int(w.size) * w.dtype.itemsize for w in weights)
    bytes_accessed = int(2 * rows_total * D * 4 + weight_bytes * (B // Bt))

    out = pl.pallas_call(
        functools.partial(decoder_kernel, num_heads=num_heads, n_valid=N,
                          block_eps=block_eps, final_eps=final_eps),
        out_shape=jax.ShapeDtypeStruct((B, Np, D), x.dtype),
        grid=(B // Bt, L),
        in_specs=in_specs,
        out_specs=pl.BlockSpec((Bt, Np, D), lambda b, l: (b, 0, 0)),
        scratch_shapes=[pltpu.VMEM((Bt, Np, D), jnp.float32)],
        compiler_params=pltpu.CompilerParams(
            dimension_semantics=("parallel", "arbitrary"),
            vmem_limit_bytes=vmem_limit_bytes),
        cost_estimate=pl.CostEstimate(flops=flops,
                                      transcendentals=transcendentals,
                                      bytes_accessed=bytes_accessed),
    )(x, *weights, params["norm_g"], params["norm_b"])

    return out[:, :N, :] if Np != N else out


# ----------------------------------------------------------------------------
# Deterministic parameter init (shapes from MAE_Decoder.__init__ / timm Block)
# QKV is stored split into per-layer-stacked w_q/w_k/w_v (L, D, D) — equivalent
# to the fused nn.Linear(dim, 3*dim) weight split column-wise — with the
# softmax scale folded into w_q AND b_q.  Matmul weights in bf16; biases /
# LayerNorm params in f32.
# ----------------------------------------------------------------------------
def init_params(key, *, dim, num_heads, mlp_ratio, num_layers,
                param_dtype=jnp.bfloat16):
    hidden = dim * mlp_ratio
    hd = dim // num_heads
    scale = hd ** -0.5
    L = num_layers
    w_q, w_k, w_v, w_proj, w_fc1, w_fc2 = [], [], [], [], [], []
    for i in range(L):
        k = jax.random.fold_in(key, i)
        ks = jax.random.split(k, 6)
        w_q.append(0.02 * jax.random.normal(ks[0], (dim, dim), jnp.float32))
        w_k.append(0.02 * jax.random.normal(ks[1], (dim, dim), jnp.float32))
        w_v.append(0.02 * jax.random.normal(ks[2], (dim, dim), jnp.float32))
        w_proj.append(0.02 * jax.random.normal(ks[3], (dim, dim), jnp.float32))
        w_fc1.append(0.02 * jax.random.normal(ks[4], (dim, hidden), jnp.float32))
        w_fc2.append(0.02 * jax.random.normal(ks[5], (hidden, dim), jnp.float32))
    # Fold the attention softmax scale into the query projection (weight and
    # bias): (x @ w_q + b_q) * scale == x @ (scale*w_q) + scale*b_q.
    w_q = jnp.stack(w_q) * scale
    b_q = scale * jnp.zeros((L, 1, dim), jnp.float32)
    return dict(
        n1_g=jnp.ones((L, 1, dim), jnp.float32),
        n1_b=jnp.zeros((L, 1, dim), jnp.float32),
        w_q=w_q.astype(param_dtype),
        b_q=b_q,
        w_k=jnp.stack(w_k).astype(param_dtype),
        b_k=jnp.zeros((L, 1, dim), jnp.float32),
        w_v=jnp.stack(w_v).astype(param_dtype),
        b_v=jnp.zeros((L, 1, dim), jnp.float32),
        w_proj=jnp.stack(w_proj).astype(param_dtype),
        b_proj=jnp.zeros((L, 1, dim), jnp.float32),
        n2_g=jnp.ones((L, 1, dim), jnp.float32),
        n2_b=jnp.zeros((L, 1, dim), jnp.float32),
        w_fc1=jnp.stack(w_fc1).astype(param_dtype),
        b_fc1=jnp.zeros((L, 1, hidden), jnp.float32),
        w_fc2=jnp.stack(w_fc2).astype(param_dtype),
        b_fc2=jnp.zeros((L, 1, dim), jnp.float32),
        norm_g=jnp.ones((1, dim), jnp.float32),
        norm_b=jnp.zeros((1, dim), jnp.float32),
    )


# ----------------------------------------------------------------------------
if __name__ == "__main__":
    # Small synthetic config consistent with MAE_Decoder:
    #   dec_embed_dim=32, dec_attention_heads=4, dec_mlp_ratio=4,
    #   dec_hidden_layers=2, dec_layer_norm_eps=1e-6.
    # NOTE: this toy shape is for a correctness/smoke run only; tune tiling on
    # the real decoder dims (D=512, H=2048, N~196-200, L=8) per the review.
    DEC_EMBED_DIM = 32
    DEC_HEADS = 4
    DEC_MLP_RATIO = 4
    DEC_LAYERS = 2
    DEC_LN_EPS = 1e-6       # final self.norm eps (config.dec_layer_norm_eps)
    BLOCK_LN_EPS = 1e-5     # nn.LayerNorm default eps inside each Block

    B, N = 2, 8

    key = jax.random.PRNGKey(0)
    k_x, k_p = jax.random.split(key)
    x = jax.random.normal(k_x, (B, N, DEC_EMBED_DIM), jnp.float32)
    params = init_params(k_p, dim=DEC_EMBED_DIM, num_heads=DEC_HEADS,
                         mlp_ratio=DEC_MLP_RATIO, num_layers=DEC_LAYERS)

    y = mae_decoder_forward(x, params, num_heads=DEC_HEADS,
                            block_eps=BLOCK_LN_EPS, final_eps=DEC_LN_EPS)
    jax.block_until_ready(y)
    assert y.shape == (B, N, DEC_EMBED_DIM) and y.dtype == jnp.float32
    assert bool(jnp.all(jnp.isfinite(y)))
    print("KERNEL_OK")
</pallas_src>

<mosaic_0001>
module attributes {stable_mosaic.version = 11 : i64} {
  func.func @decoder_kernel(%arg0: i32, %arg1: i32, %arg2: memref<1x8x32xf32, #tpu.memory_space<vmem>>, %arg3: memref<1x1x32xf32, #tpu.memory_space<vmem>>, %arg4: memref<1x1x32xf32, #tpu.memory_space<vmem>>, %arg5: memref<1x32x32xbf16, #tpu.memory_space<vmem>>, %arg6: memref<1x1x32xf32, #tpu.memory_space<vmem>>, %arg7: memref<1x32x32xbf16, #tpu.memory_space<vmem>>, %arg8: memref<1x1x32xf32, #tpu.memory_space<vmem>>, %arg9: memref<1x32x32xbf16, #tpu.memory_space<vmem>>, %arg10: memref<1x1x32xf32, #tpu.memory_space<vmem>>, %arg11: memref<1x32x32xbf16, #tpu.memory_space<vmem>>, %arg12: memref<1x1x32xf32, #tpu.memory_space<vmem>>, %arg13: memref<1x1x32xf32, #tpu.memory_space<vmem>>, %arg14: memref<1x1x32xf32, #tpu.memory_space<vmem>>, %arg15: memref<1x32x128xbf16, #tpu.memory_space<vmem>>, %arg16: memref<1x1x128xf32, #tpu.memory_space<vmem>>, %arg17: memref<1x128x32xbf16, #tpu.memory_space<vmem>>, %arg18: memref<1x1x32xf32, #tpu.memory_space<vmem>>, %arg19: memref<1x32xf32, #tpu.memory_space<vmem>>, %arg20: memref<1x32xf32, #tpu.memory_space<vmem>>, %arg21: memref<1x8x32xf32, #tpu.memory_space<vmem>>, %arg22: memref<1x8x32xf32, #tpu.memory_space<vmem>>) attributes {dimension_semantics = [#tpu.dimension_semantics<parallel>, #tpu.dimension_semantics<arbitrary>], iteration_bounds = array<i64: 2, 2>, scalar_prefetch = 0 : i64, scratch_operands = 1 : i64, tpu.core_type = #tpu.core_type<tc>, window_params = [{transform_indices = @transform_0, window_bounds = array<i64: 1, 8, 32>}, {transform_indices = @transform_1, window_bounds = array<i64: 1, 1, 32>}, {transform_indices = @transform_2, window_bounds = array<i64: 1, 1, 32>}, {transform_indices = @transform_3, window_bounds = array<i64: 1, 32, 32>}, {transform_indices = @transform_4, window_bounds = array<i64: 1, 1, 32>}, {transform_indices = @transform_5, window_bounds = array<i64: 1, 32, 32>}, {transform_indices = @transform_6, window_bounds = array<i64: 1, 1, 32>}, {transform_indices = @transform_7, window_bounds = array<i64: 1, 32, 32>}, {transform_indices = @transform_8, window_bounds = array<i64: 1, 1, 32>}, {transform_indices = @transform_9, window_bounds = array<i64: 1, 32, 32>}, {transform_indices = @transform_10, window_bounds = array<i64: 1, 1, 32>}, {transform_indices = @transform_11, window_bounds = array<i64: 1, 1, 32>}, {transform_indices = @transform_12, window_bounds = array<i64: 1, 1, 32>}, {transform_indices = @transform_13, window_bounds = array<i64: 1, 32, 128>}, {transform_indices = @transform_14, window_bounds = array<i64: 1, 1, 128>}, {transform_indices = @transform_15, window_bounds = array<i64: 1, 128, 32>}, {transform_indices = @transform_16, window_bounds = array<i64: 1, 1, 32>}, {pipeline_mode = #tpu.pipeline_mode<synchronous>, transform_indices = @transform_17, window_bounds = array<i64: 1, 32>}, {pipeline_mode = #tpu.pipeline_mode<synchronous>, transform_indices = @transform_18, window_bounds = array<i64: 1, 32>}, {transform_indices = @transform_19, window_bounds = array<i64: 1, 8, 32>}]} {
    %c0_i32 = arith.constant 0 : i32
    %0 = arith.cmpi eq, %arg1, %c0_i32 : i32
    %1 = arith.extui %0 : i1 to i32
    %c0_i32_0 = arith.constant 0 : i32
    %2 = arith.cmpi ne, %1, %c0_i32_0 : i32
    scf.if %2 {
      %c0_89 = arith.constant 0 : index
      %c0_90 = arith.constant 0 : index
      %c0_91 = arith.constant 0 : index
      %208 = vector.load %arg2[%c0_89, %c0_90, %c0_91] : memref<1x8x32xf32, #tpu.memory_space<vmem>>, vector<1x8x32xf32>
      %c0_92 = arith.constant 0 : index
      %c0_93 = arith.constant 0 : index
      %c0_94 = arith.constant 0 : index
      %209 = vector.load %arg22[%c0_92, %c0_93, %c0_94] : memref<1x8x32xf32, #tpu.memory_space<vmem>>, vector<1x8x32xf32>
      tpu.vector_store %arg22[%c0_92, %c0_93, %c0_94], %208 {strides = array<i32>} : memref<1x8x32xf32, #tpu.memory_space<vmem>>, vector<1x8x32xf32>,
    } else {
    }
    %c0 = arith.constant 0 : index
    %c0_1 = arith.constant 0 : index
    %c0_2 = arith.constant 0 : index
    %3 = vector.load %arg22[%c0, %c0_1, %c0_2] : memref<1x8x32xf32, #tpu.memory_space<vmem>>, vector<1x8x32xf32>
    %c0_3 = arith.constant 0 : index
    %c0_4 = arith.constant 0 : index
    %c0_5 = arith.constant 0 : index
    %4 = vector.load %arg3[%c0_3, %c0_4, %c0_5] : memref<1x1x32xf32, #tpu.memory_space<vmem>>, vector<1x1x32xf32>
    %5 = vector.shape_cast %4 : vector<1x1x32xf32> to vector<1x32xf32>
    %c0_6 = arith.constant 0 : index
    %c0_7 = arith.constant 0 : index
    %c0_8 = arith.constant 0 : index
    %6 = vector.load %arg4[%c0_6, %c0_7, %c0_8] : memref<1x1x32xf32, #tpu.memory_space<vmem>>, vector<1x1x32xf32>
    %7 = vector.shape_cast %6 : vector<1x1x32xf32> to vector<1x32xf32>
    %cst = arith.constant dense<0.000000e+00> : vector<1x8xf32>
    %8 = vector.multi_reduction <add>, %3, %cst [2] : vector<1x8x32xf32> to vector<1x8xf32>
    %9 = vector.shape_cast %8 : vector<1x8xf32> to vector<1x8x1xf32>
    %cst_9 = arith.constant 3.200000e+01 : f32
    %10 = vector.broadcast %cst_9 : f32 to vector<1x8x1xf32>
    %11 = arith.divf %9, %10 : vector<1x8x1xf32>
    %12 = vector.broadcast %11 : vector<1x8x1xf32> to vector<1x8x32xf32>
    %13 = arith.subf %3, %12 : vector<1x8x32xf32>
    %14 = arith.mulf %13, %13 : vector<1x8x32xf32>
    %cst_10 = arith.constant dense<0.000000e+00> : vector<1x8xf32>
    %15 = vector.multi_reduction <add>, %14, %cst_10 [2] : vector<1x8x32xf32> to vector<1x8xf32>
    %16 = vector.shape_cast %15 : vector<1x8xf32> to vector<1x8x1xf32>
    %cst_11 = arith.constant 3.200000e+01 : f32
    %17 = vector.broadcast %cst_11 : f32 to vector<1x8x1xf32>
    %18 = arith.divf %16, %17 : vector<1x8x1xf32>
    %19 = vector.broadcast %11 : vector<1x8x1xf32> to vector<1x8x32xf32>
    %20 = arith.subf %3, %19 : vector<1x8x32xf32>
    %cst_12 = arith.constant 9.99999974E-6 : f32
    %21 = vector.broadcast %cst_12 : f32 to vector<1x8x1xf32>
    %22 = arith.addf %18, %21 : vector<1x8x1xf32>
    %23 = math.rsqrt %22 : vector<1x8x1xf32>
    %24 = vector.broadcast %23 : vector<1x8x1xf32> to vector<1x8x32xf32>
    %25 = arith.mulf %20, %24 : vector<1x8x32xf32>
    %26 = vector.shape_cast %5 : vector<1x32xf32> to vector<1x1x32xf32>
    %27 = vector.broadcast %26 : vector<1x1x32xf32> to vector<1x8x32xf32>
    %28 = arith.mulf %25, %27 : vector<1x8x32xf32>
    %29 = vector.shape_cast %7 : vector<1x32xf32> to vector<1x1x32xf32>
    %30 = vector.broadcast %29 : vector<1x1x32xf32> to vector<1x8x32xf32>
    %31 = arith.addf %28, %30 : vector<1x8x32xf32>
    %32 = vector.shape_cast %31 : vector<1x8x32xf32> to vector<8x32xf32>
    %33 = arith.truncf %32 : vector<8x32xf32> to vector<8x32xbf16>
    %c0_13 = arith.constant 0 : index
    %c0_14 = arith.constant 0 : index
    %c0_15 = arith.constant 0 : index
    %34 = vector.load %arg5[%c0_13, %c0_14, %c0_15] : memref<1x32x32xbf16, #tpu.memory_space<vmem>>, vector<1x32x32xbf16>
    %35 = vector.shape_cast %34 : vector<1x32x32xbf16> to vector<32x32xbf16>
    %cst_16 = arith.constant dense<0.000000e+00> : vector<8x32xf32>
    %36 = tpu.matmul %33, %35, %cst_16 {dimension_numbers = #tpu.dot_dimension_numbers<[1], [0], [0], [1], [0, 0, 1, 1], [], []>} : vector<8x32xbf16>, vector<32x32xbf16>, vector<8x32xf32> -> vector<8x32xf32>
    %c0_17 = arith.constant 0 : index
    %c0_18 = arith.constant 0 : index
    %c0_19 = arith.constant 0 : index
    %37 = vector.load %arg6[%c0_17, %c0_18, %c0_19] : memref<1x1x32xf32, #tpu.memory_space<vmem>>, vector<1x1x32xf32>
    %38 = vector.shape_cast %37 : vector<1x1x32xf32> to vector<1x32xf32>
    %39 = vector.broadcast %38 : vector<1x32xf32> to vector<8x32xf32>
    %40 = arith.addf %36, %39 : vector<8x32xf32>
    %c0_20 = arith.constant 0 : index
    %c0_21 = arith.constant 0 : index
    %c0_22 = arith.constant 0 : index
    %41 = vector.load %arg7[%c0_20, %c0_21, %c0_22] : memref<1x32x32xbf16, #tpu.memory_space<vmem>>, vector<1x32x32xbf16>
    %42 = vector.shape_cast %41 : vector<1x32x32xbf16> to vector<32x32xbf16>
    %cst_23 = arith.constant dense<0.000000e+00> : vector<8x32xf32>
    %43 = tpu.matmul %33, %42, %cst_23 {dimension_numbers = #tpu.dot_dimension_numbers<[1], [0], [0], [1], [0, 0, 1, 1], [], []>} : vector<8x32xbf16>, vector<32x32xbf16>, vector<8x32xf32> -> vector<8x32xf32>
    %c0_24 = arith.constant 0 : index
    %c0_25 = arith.constant 0 : index
    %c0_26 = arith.constant 0 : index
    %44 = vector.load %arg8[%c0_24, %c0_25, %c0_26] : memref<1x1x32xf32, #tpu.memory_space<vmem>>, vector<1x1x32xf32>
    %45 = vector.shape_cast %44 : vector<1x1x32xf32> to vector<1x32xf32>
    %46 = vector.broadcast %45 : vector<1x32xf32> to vector<8x32xf32>
    %47 = arith.addf %43, %46 : vector<8x32xf32>
    %c0_27 = arith.constant 0 : index
    %c0_28 = arith.constant 0 : index
    %c0_29 = arith.constant 0 : index
    %48 = vector.load %arg9[%c0_27, %c0_28, %c0_29] : memref<1x32x32xbf16, #tpu.memory_space<vmem>>, vector<1x32x32xbf16>
    %49 = vector.shape_cast %48 : vector<1x32x32xbf16> to vector<32x32xbf16>
    %cst_30 = arith.constant dense<0.000000e+00> : vector<8x32xf32>
    %50 = tpu.matmul %33, %49, %cst_30 {dimension_numbers = #tpu.dot_dimension_numbers<[1], [0], [0], [1], [0, 0, 1, 1], [], []>} : vector<8x32xbf16>, vector<32x32xbf16>, vector<8x32xf32> -> vector<8x32xf32>
    %c0_31 = arith.constant 0 : index
    %c0_32 = arith.constant 0 : index
    %c0_33 = arith.constant 0 : index
    %51 = vector.load %arg10[%c0_31, %c0_32, %c0_33] : memref<1x1x32xf32, #tpu.memory_space<vmem>>, vector<1x1x32xf32>
    %52 = vector.shape_cast %51 : vector<1x1x32xf32> to vector<1x32xf32>
    %53 = vector.broadcast %52 : vector<1x32xf32> to vector<8x32xf32>
    %54 = arith.addf %50, %53 : vector<8x32xf32>
    %55 = vector.shape_cast %40 : vector<8x32xf32> to vector<1x8x32xf32>
    %56 = vector.shape_cast %47 : vector<8x32xf32> to vector<1x8x32xf32>
    %57 = vector.shape_cast %54 : vector<8x32xf32> to vector<1x8x32xf32>
    %58 = vector.extract_strided_slice %55 {offsets = [0, 0, 0], sizes = [1, 8, 8], strides = [1, 1, 1]} : vector<1x8x32xf32> to vector<1x8x8xf32>
    %59 = arith.truncf %58 : vector<1x8x8xf32> to vector<1x8x8xbf16>
    %60 = vector.extract_strided_slice %56 {offsets = [0, 0, 0], sizes = [1, 8, 8], strides = [1, 1, 1]} : vector<1x8x32xf32> to vector<1x8x8xf32>
    %61 = arith.truncf %60 : vector<1x8x8xf32> to vector<1x8x8xbf16>
    %62 = vector.extract_strided_slice %57 {offsets = [0, 0, 0], sizes = [1, 8, 8], strides = [1, 1, 1]} : vector<1x8x32xf32> to vector<1x8x8xf32>
    %63 = arith.truncf %62 : vector<1x8x8xf32> to vector<1x8x8xbf16>
    "tpu.trace_start"() <{level = 10 : i32, message = "bqd,bkd->bqk"}> : () -> ()
    %cst_34 = arith.constant dense<0.000000e+00> : vector<1x8x8xf32>
    %64 = tpu.matmul %59, %61, %cst_34 {dimension_numbers = #tpu.dot_dimension_numbers<[2], [2], [1], [1], [0, 0, 0, 1, 1, 1], [0], [0]>} : vector<1x8x8xbf16>, vector<1x8x8xbf16>, vector<1x8x8xf32> -> vector<1x8x8xf32>
    "tpu.trace_stop"() : () -> ()
    %cst_35 = arith.constant dense<0xFF800000> : vector<1x8xf32>
    %65 = vector.multi_reduction <maximumf>, %64, %cst_35 [2] : vector<1x8x8xf32> to vector<1x8xf32>
    %66 = vector.shape_cast %65 : vector<1x8xf32> to vector<1x8x1xf32>
    %67 = vector.broadcast %66 : vector<1x8x1xf32> to vector<1x8x8xf32>
    %68 = arith.subf %64, %67 : vector<1x8x8xf32>
    %69 = math.exp %68 : vector<1x8x8xf32>
    %cst_36 = arith.constant dense<0.000000e+00> : vector<1x8xf32>
    %70 = vector.multi_reduction <add>, %69, %cst_36 [2] : vector<1x8x8xf32> to vector<1x8xf32>
    %71 = vector.shape_cast %70 : vector<1x8xf32> to vector<1x8x1xf32>
    %72 = tpu.reciprocal %71 {approx = true} : vector<1x8x1xf32> -> vector<1x8x1xf32>
    %73 = vector.broadcast %72 : vector<1x8x1xf32> to vector<1x8x8xf32>
    %74 = arith.mulf %69, %73 : vector<1x8x8xf32>
    %75 = arith.truncf %74 : vector<1x8x8xf32> to vector<1x8x8xbf16>
    "tpu.trace_start"() <{level = 10 : i32, message = "bqk,bkd->bqd"}> : () -> ()
    %cst_37 = arith.constant dense<0.000000e+00> : vector<1x8x8xf32>
    %76 = tpu.matmul %75, %63, %cst_37 {dimension_numbers = #tpu.dot_dimension_numbers<[2], [1], [1], [2], [0, 0, 0, 1, 1, 2], [0], [0]>} : vector<1x8x8xbf16>, vector<1x8x8xbf16>, vector<1x8x8xf32> -> vector<1x8x8xf32>
    "tpu.trace_stop"() : () -> ()
    %77 = vector.shape_cast %76 : vector<1x8x8xf32> to vector<8x8xf32>
    %78 = vector.extract_strided_slice %55 {offsets = [0, 0, 8], sizes = [1, 8, 8], strides = [1, 1, 1]} : vector<1x8x32xf32> to vector<1x8x8xf32>
    %79 = arith.truncf %78 : vector<1x8x8xf32> to vector<1x8x8xbf16>
    %80 = vector.extract_strided_slice %56 {offsets = [0, 0, 8], sizes = [1, 8, 8], strides = [1, 1, 1]} : vector<1x8x32xf32> to vector<1x8x8xf32>
    %81 = arith.truncf %80 : vector<1x8x8xf32> to vector<1x8x8xbf16>
    %82 = vector.extract_strided_slice %57 {offsets = [0, 0, 8], sizes = [1, 8, 8], strides = [1, 1, 1]} : vector<1x8x32xf32> to vector<1x8x8xf32>
    %83 = arith.truncf %82 : vector<1x8x8xf32> to vector<1x8x8xbf16>
    "tpu.trace_start"() <{level = 10 : i32, message = "bqd,bkd->bqk"}> : () -> ()
    %cst_38 = arith.constant dense<0.000000e+00> : vector<1x8x8xf32>
    %84 = tpu.matmul %79, %81, %cst_38 {dimension_numbers = #tpu.dot_dimension_numbers<[2], [2], [1], [1], [0, 0, 0, 1, 1, 1], [0], [0]>} : vector<1x8x8xbf16>, vector<1x8x8xbf16>, vector<1x8x8xf32> -> vector<1x8x8xf32>
    "tpu.trace_stop"() : () -> ()
    %cst_39 = arith.constant dense<0xFF800000> : vector<1x8xf32>
    %85 = vector.multi_reduction <maximumf>, %84, %cst_39 [2] : vector<1x8x8xf32> to vector<1x8xf32>
    %86 = vector.shape_cast %85 : vector<1x8xf32> to vector<1x8x1xf32>
    %87 = vector.broadcast %86 : vector<1x8x1xf32> to vector<1x8x8xf32>
    %88 = arith.subf %84, %87 : vector<1x8x8xf32>
    %89 = math.exp %88 : vector<1x8x8xf32>
    %cst_40 = arith.constant dense<0.000000e+00> : vector<1x8xf32>
    %90 = vector.multi_reduction <add>, %89, %cst_40 [2] : vector<1x8x8xf32> to vector<1x8xf32>
    %91 = vector.shape_cast %90 : vector<1x8xf32> to vector<1x8x1xf32>
    %92 = tpu.reciprocal %91 {approx = true} : vector<1x8x1xf32> -> vector<1x8x1xf32>
    %93 = vector.broadcast %92 : vector<1x8x1xf32> to vector<1x8x8xf32>
    %94 = arith.mulf %89, %93 : vector<1x8x8xf32>
    %95 = arith.truncf %94 : vector<1x8x8xf32> to vector<1x8x8xbf16>
    "tpu.trace_start"() <{level = 10 : i32, message = "bqk,bkd->bqd"}> : () -> ()
    %cst_41 = arith.constant dense<0.000000e+00> : vector<1x8x8xf32>
    %96 = tpu.matmul %95, %83, %cst_41 {dimension_numbers = #tpu.dot_dimension_numbers<[2], [1], [1], [2], [0, 0, 0, 1, 1, 2], [0], [0]>} : vector<1x8x8xbf16>, vector<1x8x8xbf16>, vector<1x8x8xf32> -> vector<1x8x8xf32>
    "tpu.trace_stop"() : () -> ()
    %97 = vector.shape_cast %96 : vector<1x8x8xf32> to vector<8x8xf32>
    %98 = vector.extract_strided_slice %55 {offsets = [0, 0, 16], sizes = [1, 8, 8], strides = [1, 1, 1]} : vector<1x8x32xf32> to vector<1x8x8xf32>
    %99 = arith.truncf %98 : vector<1x8x8xf32> to vector<1x8x8xbf16>
    %100 = vector.extract_strided_slice %56 {offsets = [0, 0, 16], sizes = [1, 8, 8], strides = [1, 1, 1]} : vector<1x8x32xf32> to vector<1x8x8xf32>
    %101 = arith.truncf %100 : vector<1x8x8xf32> to vector<1x8x8xbf16>
    %102 = vector.extract_strided_slice %57 {offsets = [0, 0, 16], sizes = [1, 8, 8], strides = [1, 1, 1]} : vector<1x8x32xf32> to vector<1x8x8xf32>
    %103 = arith.truncf %102 : vector<1x8x8xf32> to vector<1x8x8xbf16>
    "tpu.trace_start"() <{level = 10 : i32, message = "bqd,bkd->bqk"}> : () -> ()
    %cst_42 = arith.constant dense<0.000000e+00> : vector<1x8x8xf32>
    %104 = tpu.matmul %99, %101, %cst_42 {dimension_numbers = #tpu.dot_dimension_numbers<[2], [2], [1], [1], [0, 0, 0, 1, 1, 1], [0], [0]>} : vector<1x8x8xbf16>, vector<1x8x8xbf16>, vector<1x8x8xf32> -> vector<1x8x8xf32>
    "tpu.trace_stop"() : () -> ()
    %cst_43 = arith.constant dense<0xFF800000> : vector<1x8xf32>
    %105 = vector.multi_reduction <maximumf>, %104, %cst_43 [2] : vector<1x8x8xf32> to vector<1x8xf32>
    %106 = vector.shape_cast %105 : vector<1x8xf32> to vector<1x8x1xf32>
    %107 = vector.broadcast %106 : vector<1x8x1xf32> to vector<1x8x8xf32>
    %108 = arith.subf %104, %107 : vector<1x8x8xf32>
    %109 = math.exp %108 : vector<1x8x8xf32>
    %cst_44 = arith.constant dense<0.000000e+00> : vector<1x8xf32>
    %110 = vector.multi_reduction <add>, %109, %cst_44 [2] : vector<1x8x8xf32> to vector<1x8xf32>
    %111 = vector.shape_cast %110 : vector<1x8xf32> to vector<1x8x1xf32>
    %112 = tpu.reciprocal %111 {approx = true} : vector<1x8x1xf32> -> vector<1x8x1xf32>
    %113 = vector.broadcast %112 : vector<1x8x1xf32> to vector<1x8x8xf32>
    %114 = arith.mulf %109, %113 : vector<1x8x8xf32>
    %115 = arith.truncf %114 : vector<1x8x8xf32> to vector<1x8x8xbf16>
    "tpu.trace_start"() <{level = 10 : i32, message = "bqk,bkd->bqd"}> : () -> ()
    %cst_45 = arith.constant dense<0.000000e+00> : vector<1x8x8xf32>
    %116 = tpu.matmul %115, %103, %cst_45 {dimension_numbers = #tpu.dot_dimension_numbers<[2], [1], [1], [2], [0, 0, 0, 1, 1, 2], [0], [0]>} : vector<1x8x8xbf16>, vector<1x8x8xbf16>, vector<1x8x8xf32> -> vector<1x8x8xf32>
    "tpu.trace_stop"() : () -> ()
    %117 = vector.shape_cast %116 : vector<1x8x8xf32> to vector<8x8xf32>
    %118 = vector.extract_strided_slice %55 {offsets = [0, 0, 24], sizes = [1, 8, 8], strides = [1, 1, 1]} : vector<1x8x32xf32> to vector<1x8x8xf32>
    %119 = arith.truncf %118 : vector<1x8x8xf32> to vector<1x8x8xbf16>
    %120 = vector.extract_strided_slice %56 {offsets = [0, 0, 24], sizes = [1, 8, 8], strides = [1, 1, 1]} : vector<1x8x32xf32> to vector<1x8x8xf32>
    %121 = arith.truncf %120 : vector<1x8x8xf32> to vector<1x8x8xbf16>
    %122 = vector.extract_strided_slice %57 {offsets = [0, 0, 24], sizes = [1, 8, 8], strides = [1, 1, 1]} : vector<1x8x32xf32> to vector<1x8x8xf32>
    %123 = arith.truncf %122 : vector<1x8x8xf32> to vector<1x8x8xbf16>
    "tpu.trace_start"() <{level = 10 : i32, message = "bqd,bkd->bqk"}> : () -> ()
    %cst_46 = arith.constant dense<0.000000e+00> : vector<1x8x8xf32>
    %124 = tpu.matmul %119, %121, %cst_46 {dimension_numbers = #tpu.dot_dimension_numbers<[2], [2], [1], [1], [0, 0, 0, 1, 1, 1], [0], [0]>} : vector<1x8x8xbf16>, vector<1x8x8xbf16>, vector<1x8x8xf32> -> vector<1x8x8xf32>
    "tpu.trace_stop"() : () -> ()
    %cst_47 = arith.constant dense<0xFF800000> : vector<1x8xf32>
    %125 = vector.multi_reduction <maximumf>, %124, %cst_47 [2] : vector<1x8x8xf32> to vector<1x8xf32>
    %126 = vector.shape_cast %125 : vector<1x8xf32> to vector<1x8x1xf32>
    %127 = vector.broadcast %126 : vector<1x8x1xf32> to vector<1x8x8xf32>
    %128 = arith.subf %124, %127 : vector<1x8x8xf32>
    %129 = math.exp %128 : vector<1x8x8xf32>
    %cst_48 = arith.constant dense<0.000000e+00> : vector<1x8xf32>
    %130 = vector.multi_reduction <add>, %129, %cst_48 [2] : vector<1x8x8xf32> to vector<1x8xf32>
    %131 = vector.shape_cast %130 : vector<1x8xf32> to vector<1x8x1xf32>
    %132 = tpu.reciprocal %131 {approx = true} : vector<1x8x1xf32> -> vector<1x8x1xf32>
    %133 = vector.broadcast %132 : vector<1x8x1xf32> to vector<1x8x8xf32>
    %134 = arith.mulf %129, %133 : vector<1x8x8xf32>
    %135 = arith.truncf %134 : vector<1x8x8xf32> to vector<1x8x8xbf16>
    "tpu.trace_start"() <{level = 10 : i32, message = "bqk,bkd->bqd"}> : () -> ()
    %cst_49 = arith.constant dense<0.000000e+00> : vector<1x8x8xf32>
    %136 = tpu.matmul %135, %123, %cst_49 {dimension_numbers = #tpu.dot_dimension_numbers<[2], [1], [1], [2], [0, 0, 0, 1, 1, 2], [0], [0]>} : vector<1x8x8xbf16>, vector<1x8x8xbf16>, vector<1x8x8xf32> -> vector<1x8x8xf32>
    "tpu.trace_stop"() : () -> ()
    %137 = vector.shape_cast %136 : vector<1x8x8xf32> to vector<8x8xf32>
    %138 = tpu.concatenate %77, %97, %117, %137 in 1 : vector<8x8xf32>, vector<8x8xf32>, vector<8x8xf32>, vector<8x8xf32> -> vector<8x32xf32>
    %139 = arith.truncf %138 : vector<8x32xf32> to vector<8x32xbf16>
    %c0_50 = arith.constant 0 : index
    %c0_51 = arith.constant 0 : index
    %c0_52 = arith.constant 0 : index
    %140 = vector.load %arg11[%c0_50, %c0_51, %c0_52] : memref<1x32x32xbf16, #tpu.memory_space<vmem>>, vector<1x32x32xbf16>
    %141 = vector.shape_cast %140 : vector<1x32x32xbf16> to vector<32x32xbf16>
    %cst_53 = arith.constant dense<0.000000e+00> : vector<8x32xf32>
    %142 = tpu.matmul %139, %141, %cst_53 {dimension_numbers = #tpu.dot_dimension_numbers<[1], [0], [0], [1], [0, 0, 1, 1], [], []>} : vector<8x32xbf16>, vector<32x32xbf16>, vector<8x32xf32> -> vector<8x32xf32>
    %c0_54 = arith.constant 0 : index
    %c0_55 = arith.constant 0 : index
    %c0_56 = arith.constant 0 : index
    %143 = vector.load %arg12[%c0_54, %c0_55, %c0_56] : memref<1x1x32xf32, #tpu.memory_space<vmem>>, vector<1x1x32xf32>
    %144 = vector.shape_cast %143 : vector<1x1x32xf32> to vector<1x32xf32>
    %145 = vector.broadcast %144 : vector<1x32xf32> to vector<8x32xf32>
    %146 = arith.addf %142, %145 : vector<8x32xf32>
    %147 = vector.shape_cast %146 : vector<8x32xf32> to vector<1x8x32xf32>
    %148 = arith.addf %3, %147 : vector<1x8x32xf32>
    %c0_57 = arith.constant 0 : index
    %c0_58 = arith.constant 0 : index
    %c0_59 = arith.constant 0 : index
    %149 = vector.load %arg13[%c0_57, %c0_58, %c0_59] : memref<1x1x32xf32, #tpu.memory_space<vmem>>, vector<1x1x32xf32>
    %150 = vector.shape_cast %149 : vector<1x1x32xf32> to vector<1x32xf32>
    %c0_60 = arith.constant 0 : index
    %c0_61 = arith.constant 0 : index
    %c0_62 = arith.constant 0 : index
    %151 = vector.load %arg14[%c0_60, %c0_61, %c0_62] : memref<1x1x32xf32, #tpu.memory_space<vmem>>, vector<1x1x32xf32>
    %152 = vector.shape_cast %151 : vector<1x1x32xf32> to vector<1x32xf32>
    %cst_63 = arith.constant dense<0.000000e+00> : vector<1x8xf32>
    %153 = vector.multi_reduction <add>, %148, %cst_63 [2] : vector<1x8x32xf32> to vector<1x8xf32>
    %154 = vector.shape_cast %153 : vector<1x8xf32> to vector<1x8x1xf32>
    %cst_64 = arith.constant 3.200000e+01 : f32
    %155 = vector.broadcast %cst_64 : f32 to vector<1x8x1xf32>
    %156 = arith.divf %154, %155 : vector<1x8x1xf32>
    %157 = vector.broadcast %156 : vector<1x8x1xf32> to vector<1x8x32xf32>
    %158 = arith.subf %148, %157 : vector<1x8x32xf32>
    %159 = arith.mulf %158, %158 : vector<1x8x32xf32>
    %cst_65 = arith.constant dense<0.000000e+00> : vector<1x8xf32>
    %160 = vector.multi_reduction <add>, %159, %cst_65 [2] : vector<1x8x32xf32> to vector<1x8xf32>
    %161 = vector.shape_cast %160 : vector<1x8xf32> to vector<1x8x1xf32>
    %cst_66 = arith.constant 3.200000e+01 : f32
    %162 = vector.broadcast %cst_66 : f32 to vector<1x8x1xf32>
    %163 = arith.divf %161, %162 : vector<1x8x1xf32>
    %164 = vector.broadcast %156 : vector<1x8x1xf32> to vector<1x8x32xf32>
    %165 = arith.subf %148, %164 : vector<1x8x32xf32>
    %cst_67 = arith.constant 9.99999974E-6 : f32
    %166 = vector.broadcast %cst_67 : f32 to vector<1x8x1xf32>
    %167 = arith.addf %163, %166 : vector<1x8x1xf32>
    %168 = math.rsqrt %167 : vector<1x8x1xf32>
    %169 = vector.broadcast %168 : vector<1x8x1xf32> to vector<1x8x32xf32>
    %170 = arith.mulf %165, %169 : vector<1x8x32xf32>
    %171 = vector.shape_cast %150 : vector<1x32xf32> to vector<1x1x32xf32>
    %172 = vector.broadcast %171 : vector<1x1x32xf32> to vector<1x8x32xf32>
    %173 = arith.mulf %170, %172 : vector<1x8x32xf32>
    %174 = vector.shape_cast %152 : vector<1x32xf32> to vector<1x1x32xf32>
    %175 = vector.broadcast %174 : vector<1x1x32xf32> to vector<1x8x32xf32>
    %176 = arith.addf %173, %175 : vector<1x8x32xf32>
    %177 = vector.shape_cast %176 : vector<1x8x32xf32> to vector<8x32xf32>
    %178 = arith.truncf %177 : vector<8x32xf32> to vector<8x32xbf16>
    %c0_68 = arith.constant 0 : index
    %c0_69 = arith.constant 0 : index
    %c0_70 = arith.constant 0 : index
    %179 = vector.load %arg15[%c0_68, %c0_69, %c0_70] : memref<1x32x128xbf16, #tpu.memory_space<vmem>>, vector<1x32x128xbf16>
    %180 = vector.shape_cast %179 : vector<1x32x128xbf16> to vector<32x128xbf16>
    %cst_71 = arith.constant dense<0.000000e+00> : vector<8x128xf32>
    %181 = tpu.matmul %178, %180, %cst_71 {dimension_numbers = #tpu.dot_dimension_numbers<[1], [0], [0], [1], [0, 0, 1, 1], [], []>} : vector<8x32xbf16>, vector<32x128xbf16>, vector<8x128xf32> -> vector<8x128xf32>
    %c0_72 = arith.constant 0 : index
    %c0_73 = arith.constant 0 : index
    %c0_74 = arith.constant 0 : index
    %182 = vector.load %arg16[%c0_72, %c0_73, %c0_74] : memref<1x1x128xf32, #tpu.memory_space<vmem>>, vector<1x1x128xf32>
    %183 = vector.shape_cast %182 : vector<1x1x128xf32> to vector<1x128xf32>
    %184 = vector.broadcast %183 : vector<1x128xf32> to vector<8x128xf32>
    %185 = arith.addf %181, %184 : vector<8x128xf32>
    %cst_75 = arith.constant 5.000000e-01 : f32
    %186 = vector.broadcast %cst_75 : f32 to vector<8x128xf32>
    %187 = arith.mulf %186, %185 : vector<8x128xf32>
    %cst_76 = arith.constant 0.707106769 : f32
    %188 = vector.broadcast %cst_76 : f32 to vector<8x128xf32>
    %189 = arith.mulf %185, %188 : vector<8x128xf32>
    %190 = math.erf %189 : vector<8x128xf32>
    %cst_77 = arith.constant 1.000000e+00 : f32
    %191 = vector.broadcast %cst_77 : f32 to vector<8x128xf32>
    %192 = arith.addf %191, %190 : vector<8x128xf32>
    %193 = arith.mulf %187, %192 : vector<8x128xf32>
    %194 = arith.truncf %193 : vector<8x128xf32> to vector<8x128xbf16>
    %c0_78 = arith.constant 0 : index
    %c0_79 = arith.constant 0 : index
    %c0_80 = arith.constant 0 : index
    %195 = vector.load %arg17[%c0_78, %c0_79, %c0_80] : memref<1x128x32xbf16, #tpu.memory_space<vmem>>, vector<1x128x32xbf16>
    %196 = vector.shape_cast %195 : vector<1x128x32xbf16> to vector<128x32xbf16>
    %cst_81 = arith.constant dense<0.000000e+00> : vector<8x32xf32>
    %197 = tpu.matmul %194, %196, %cst_81 {dimension_numbers = #tpu.dot_dimension_numbers<[1], [0], [0], [1], [0, 0, 1, 1], [], []>} : vector<8x128xbf16>, vector<128x32xbf16>, vector<8x32xf32> -> vector<8x32xf32>
    %c0_82 = arith.constant 0 : index
    %c0_83 = arith.constant 0 : index
    %c0_84 = arith.constant 0 : index
    %198 = vector.load %arg18[%c0_82, %c0_83, %c0_84] : memref<1x1x32xf32, #tpu.memory_space<vmem>>, vector<1x1x32xf32>
    %199 = vector.shape_cast %198 : vector<1x1x32xf32> to vector<1x32xf32>
    %200 = vector.broadcast %199 : vector<1x32xf32> to vector<8x32xf32>
    %201 = arith.addf %197, %200 : vector<8x32xf32>
    %202 = vector.shape_cast %201 : vector<8x32xf32> to vector<1x8x32xf32>
    %203 = arith.addf %148, %202 : vector<1x8x32xf32>
    %c0_85 = arith.constant 0 : index
    %c0_86 = arith.constant 0 : index
    %c0_87 = arith.constant 0 : index
    %204 = vector.load %arg22[%c0_85, %c0_86, %c0_87] : memref<1x8x32xf32, #tpu.memory_space<vmem>>, vector<1x8x32xf32>
    tpu.vector_store %arg22[%c0_85, %c0_86, %c0_87], %203 {strides = array<i32>} : memref<1x8x32xf32, #tpu.memory_space<vmem>>, vector<1x8x32xf32>,
    %c1_i32 = arith.constant 1 : i32
    %205 = arith.cmpi eq, %arg1, %c1_i32 : i32
    %206 = arith.extui %205 : i1 to i32
    %c0_i32_88 = arith.constant 0 : i32
    %207 = arith.cmpi ne, %206, %c0_i32_88 : i32
    scf.if %207 {
      %c0_89 = arith.constant 0 : index
      %c0_90 = arith.constant 0 : index
      %208 = vector.load %arg19[%c0_89, %c0_90] : memref<1x32xf32, #tpu.memory_space<vmem>>, vector<1x32xf32>
      %c0_91 = arith.constant 0 : index
      %c0_92 = arith.constant 0 : index
      %209 = vector.load %arg20[%c0_91, %c0_92] : memref<1x32xf32, #tpu.memory_space<vmem>>, vector<1x32xf32>
      %cst_93 = arith.constant dense<0.000000e+00> : vector<1x8xf32>
      %210 = vector.multi_reduction <add>, %203, %cst_93 [2] : vector<1x8x32xf32> to vector<1x8xf32>
      %211 = vector.shape_cast %210 : vector<1x8xf32> to vector<1x8x1xf32>
      %cst_94 = arith.constant 3.200000e+01 : f32
      %212 = vector.broadcast %cst_94 : f32 to vector<1x8x1xf32>
      %213 = arith.divf %211, %212 : vector<1x8x1xf32>
      %214 = vector.broadcast %213 : vector<1x8x1xf32> to vector<1x8x32xf32>
      %215 = arith.subf %203, %214 : vector<1x8x32xf32>
      %216 = arith.mulf %215, %215 : vector<1x8x32xf32>
      %cst_95 = arith.constant dense<0.000000e+00> : vector<1x8xf32>
      %217 = vector.multi_reduction <add>, %216, %cst_95 [2] : vector<1x8x32xf32> to vector<1x8xf32>
      %218 = vector.shape_cast %217 : vector<1x8xf32> to vector<1x8x1xf32>
      %cst_96 = arith.constant 3.200000e+01 : f32
      %219 = vector.broadcast %cst_96 : f32 to vector<1x8x1xf32>
      %220 = arith.divf %218, %219 : vector<1x8x1xf32>
      %221 = vector.broadcast %213 : vector<1x8x1xf32> to vector<1x8x32xf32>
      %222 = arith.subf %203, %221 : vector<1x8x32xf32>
      %cst_97 = arith.constant 9.99999997E-7 : f32
      %223 = vector.broadcast %cst_97 : f32 to vector<1x8x1xf32>
      %224 = arith.addf %220, %223 : vector<1x8x1xf32>
      %225 = math.rsqrt %224 : vector<1x8x1xf32>
      %226 = vector.broadcast %225 : vector<1x8x1xf32> to vector<1x8x32xf32>
      %227 = arith.mulf %222, %226 : vector<1x8x32xf32>
      %228 = vector.shape_cast %208 : vector<1x32xf32> to vector<1x1x32xf32>
      %229 = vector.broadcast %228 : vector<1x1x32xf32> to vector<1x8x32xf32>
      %230 = arith.mulf %227, %229 : vector<1x8x32xf32>
      %231 = vector.shape_cast %209 : vector<1x32xf32> to vector<1x1x32xf32>
      %232 = vector.broadcast %231 : vector<1x1x32xf32> to vector<1x8x32xf32>
      %233 = arith.addf %230, %232 : vector<1x8x32xf32>
      %c0_98 = arith.constant 0 : index
      %c0_99 = arith.constant 0 : index
      %c0_100 = arith.constant 0 : index
      %234 = vector.load %arg21[%c0_98, %c0_99, %c0_100] : memref<1x8x32xf32, #tpu.memory_space<vmem>>, vector<1x8x32xf32>
      tpu.vector_store %arg21[%c0_98, %c0_99, %c0_100], %233 {strides = array<i32>} : memref<1x8x32xf32, #tpu.memory_space<vmem>>, vector<1x8x32xf32>,
    } else {
    }
    return
  }
  func.func @transform_0(%arg0: i32, %arg1: i32) -> (i32, i32, i32) {
    %c0_i32 = arith.constant 0 : i32
    %c0_i32_0 = arith.constant 0 : i32
    %c0_i32_1 = arith.constant 0 : i32
    return %arg0, %c0_i32, %c0_i32_0 : i32, i32, i32
  }
  func.func @transform_1(%arg0: i32, %arg1: i32) -> (i32, i32, i32) {
    %c0_i32 = arith.constant 0 : i32
    %c0_i32_0 = arith.constant 0 : i32
    %c0_i32_1 = arith.constant 0 : i32
    return %arg1, %c0_i32, %c0_i32_0 : i32, i32, i32
  }
  func.func @transform_2(%arg0: i32, %arg1: i32) -> (i32, i32, i32) {
    %c0_i32 = arith.constant 0 : i32
    %c0_i32_0 = arith.constant 0 : i32
    %c0_i32_1 = arith.constant 0 : i32
    return %arg1, %c0_i32, %c0_i32_0 : i32, i32, i32
  }
  func.func @transform_3(%arg0: i32, %arg1: i32) -> (i32, i32, i32) {
    %c0_i32 = arith.constant 0 : i32
    %c0_i32_0 = arith.constant 0 : i32
    %c0_i32_1 = arith.constant 0 : i32
    return %arg1, %c0_i32, %c0_i32_0 : i32, i32, i32
  }
  func.func @transform_4(%arg0: i32, %arg1: i32) -> (i32, i32, i32) {
    %c0_i32 = arith.constant 0 : i32
    %c0_i32_0 = arith.constant 0 : i32
    %c0_i32_1 = arith.constant 0 : i32
    return %arg1, %c0_i32, %c0_i32_0 : i32, i32, i32
  }
  func.func @transform_5(%arg0: i32, %arg1: i32) -> (i32, i32, i32) {
    %c0_i32 = arith.constant 0 : i32
    %c0_i32_0 = arith.constant 0 : i32
    %c0_i32_1 = arith.constant 0 : i32
    return %arg1, %c0_i32, %c0_i32_0 : i32, i32, i32
  }
  func.func @transform_6(%arg0: i32, %arg1: i32) -> (i32, i32, i32) {
    %c0_i32 = arith.constant 0 : i32
    %c0_i32_0 = arith.constant 0 : i32
    %c0_i32_1 = arith.constant 0 : i32
    return %arg1, %c0_i32, %c0_i32_0 : i32, i32, i32
  }
  func.func @transform_7(%arg0: i32, %arg1: i32) -> (i32, i32, i32) {
    %c0_i32 = arith.constant 0 : i32
    %c0_i32_0 = arith.constant 0 : i32
    %c0_i32_1 = arith.constant 0 : i32
    return %arg1, %c0_i32, %c0_i32_0 : i32, i32, i32
  }
  func.func @transform_8(%arg0: i32, %arg1: i32) -> (i32, i32, i32) {
    %c0_i32 = arith.constant 0 : i32
    %c0_i32_0 = arith.constant 0 : i32
    %c0_i32_1 = arith.constant 0 : i32
    return %arg1, %c0_i32, %c0_i32_0 : i32, i32, i32
  }
  func.func @transform_9(%arg0: i32, %arg1: i32) -> (i32, i32, i32) {
    %c0_i32 = arith.constant 0 : i32
    %c0_i32_0 = arith.constant 0 : i32
    %c0_i32_1 = arith.constant 0 : i32
    return %arg1, %c0_i32, %c0_i32_0 : i32, i32, i32
  }
  func.func @transform_10(%arg0: i32, %arg1: i32) -> (i32, i32, i32) {
    %c0_i32 = arith.constant 0 : i32
    %c0_i32_0 = arith.constant 0 : i32
    %c0_i32_1 = arith.constant 0 : i32
    return %arg1, %c0_i32, %c0_i32_0 : i32, i32, i32
  }
  func.func @transform_11(%arg0: i32, %arg1: i32) -> (i32, i32, i32) {
    %c0_i32 = arith.constant 0 : i32
    %c0_i32_0 = arith.constant 0 : i32
    %c0_i32_1 = arith.constant 0 : i32
    return %arg1, %c0_i32, %c0_i32_0 : i32, i32, i32
  }
  func.func @transform_12(%arg0: i32, %arg1: i32) -> (i32, i32, i32) {
    %c0_i32 = arith.constant 0 : i32
    %c0_i32_0 = arith.constant 0 : i32
    %c0_i32_1 = arith.constant 0 : i32
    return %arg1, %c0_i32, %c0_i32_0 : i32, i32, i32
  }
  func.func @transform_13(%arg0: i32, %arg1: i32) -> (i32, i32, i32) {
    %c0_i32 = arith.constant 0 : i32
    %c0_i32_0 = arith.constant 0 : i32
    %c0_i32_1 = arith.constant 0 : i32
    return %arg1, %c0_i32, %c0_i32_0 : i32, i32, i32
  }
  func.func @transform_14(%arg0: i32, %arg1: i32) -> (i32, i32, i32) {
    %c0_i32 = arith.constant 0 : i32
    %c0_i32_0 = arith.constant 0 : i32
    %c0_i32_1 = arith.constant 0 : i32
    return %arg1, %c0_i32, %c0_i32_0 : i32, i32, i32
  }
  func.func @transform_15(%arg0: i32, %arg1: i32) -> (i32, i32, i32) {
    %c0_i32 = arith.constant 0 : i32
    %c0_i32_0 = arith.constant 0 : i32
    %c0_i32_1 = arith.constant 0 : i32
    return %arg1, %c0_i32, %c0_i32_0 : i32, i32, i32
  }
  func.func @transform_16(%arg0: i32, %arg1: i32) -> (i32, i32, i32) {
    %c0_i32 = arith.constant 0 : i32
    %c0_i32_0 = arith.constant 0 : i32
    %c0_i32_1 = arith.constant 0 : i32
    return %arg1, %c0_i32, %c0_i32_0 : i32, i32, i32
  }
  func.func @transform_17(%arg0: i32, %arg1: i32) -> (i32, i32) {
    %c0_i32 = arith.constant 0 : i32
    %c0_i32_0 = arith.constant 0 : i32
    %c0_i32_1 = arith.constant 0 : i32
    return %c0_i32, %c0_i32_0 : i32, i32
  }
  func.func @transform_18(%arg0: i32, %arg1: i32) -> (i32, i32) {
    %c0_i32 = arith.constant 0 : i32
    %c0_i32_0 = arith.constant 0 : i32
    %c0_i32_1 = arith.constant 0 : i32
    return %c0_i32, %c0_i32_0 : i32, i32
  }
  func.func @transform_19(%arg0: i32, %arg1: i32) -> (i32, i32, i32) {
    %c0_i32 = arith.constant 0 : i32
    %c0_i32_0 = arith.constant 0 : i32
    %c0_i32_1 = arith.constant 0 : i32
    return %arg0, %c0_i32, %c0_i32_0 : i32, i32, i32
  }
}

</mosaic_0001>

<llo_original>
// kernel: tpu_custom_call.1
$region0: #{tpu_custom_call.1}
  #allocation0 [shape = 'u32[]', space=smem, size = 0x4, offset = 0x4, fixed_abs, tag = 'smem constant byte address 0x4 - core index']
  #allocation1 [shape = 'u32[144,128]{1,0:T(1,128)}', space=vmem, size = 0x12000, scoped, tag = 'internal scratch']
  #allocation2 [shape = 'f32[1,8,32]{2,1,0:T(8,128)}', space=vmem, size = 0x1000, scoped, tag = 'scratch operand']
  %s0 = inlined_call_operand.hbm [shape: f32[2,8,32], index: 0, kind: input, shape index: {}]
  %s1 = inlined_call_operand.vmem [shape: f32[2,1,32], index: 1, kind: input, shape index: {}]
  %s2 = inlined_call_operand.vmem [shape: f32[2,1,32], index: 2, kind: input, shape index: {}]
  %s3 = inlined_call_operand.vmem [shape: bf16[2,32,32], index: 3, kind: input, shape index: {}]
  %s4 = inlined_call_operand.vmem [shape: f32[2,1,32], index: 4, kind: input, shape index: {}]
  %s5 = inlined_call_operand.vmem [shape: bf16[2,32,32], index: 5, kind: input, shape index: {}]
  %s6 = inlined_call_operand.vmem [shape: f32[2,1,32], index: 6, kind: input, shape index: {}]
  %s7 = inlined_call_operand.vmem [shape: bf16[2,32,32], index: 7, kind: input, shape index: {}]
  %s8 = inlined_call_operand.vmem [shape: f32[2,1,32], index: 8, kind: input, shape index: {}]
  %s9 = inlined_call_operand.vmem [shape: bf16[2,32,32], index: 9, kind: input, shape index: {}]
  %s10 = inlined_call_operand.vmem [shape: f32[2,1,32], index: 10, kind: input, shape index: {}]
  %s11 = inlined_call_operand.vmem [shape: f32[2,1,32], index: 11, kind: input, shape index: {}]
  %s12 = inlined_call_operand.vmem [shape: f32[2,1,32], index: 12, kind: input, shape index: {}]
  %s13 = inlined_call_operand.vmem [shape: bf16[2,32,128], index: 13, kind: input, shape index: {}]
  %s14 = inlined_call_operand.vmem [shape: f32[2,1,128], index: 14, kind: input, shape index: {}]
  %s15 = inlined_call_operand.vmem [shape: bf16[2,128,32], index: 15, kind: input, shape index: {}]
  %s16 = inlined_call_operand.vmem [shape: f32[2,1,32], index: 16, kind: input, shape index: {}]
  %s17 = inlined_call_operand.vmem [shape: f32[1,32], index: 17, kind: input, shape index: {}]
  %s18 = inlined_call_operand.vmem [shape: f32[1,32], index: 18, kind: input, shape index: {}]
  %s19 = inlined_call_operand.hbm [shape: f32[2,8,32], index: 19, kind: output, shape index: {}]
  %s20 = sld [smem:[#allocation0]]
  $region121: #{tpu_custom_call.1} parent=0
    _
  %s22 = ssub.s32 1, %s20
  %s23 = scalar_select 0, %s22, %s20
  $region1: #{tpu_custom_call.1} parent=0
    #allocation3 [shape = 'u8[8192]{0}', space=vmem, size = 0x2000, scoped, tag = 'input window, operand 0']
    #allocation4 [shape = 's32[2]{0}', space=sflag, size = 0x8, scoped, tag = 'scoped memory for tpu_custom_call.1']
    #allocation5 [shape = 's32[2]{0}', space=sflag, size = 0x8, scoped, tag = 'scoped memory for tpu_custom_call.1']
    #allocation6 [shape = 'u8[8192]{0}', space=vmem, size = 0x2000, scoped, tag = 'output window, operand 0']
    %24 = vsyncpa [#allocation4], 0
    %s25 = scalar_lea.sflag [#allocation4], 1
    %26 = vsyncpa %s25, 0
    %27 = vsyncpa [#allocation5], 0
    %s28 = scalar_lea.sflag [#allocation5], 1
    %29 = vsyncpa %s28, 0
    loop: start=0, step=1, limit=6
    $region2: #{tpu_custom_call.1} parent=1 // loop_pre_header
      _
    $region3: #{tpu_custom_call.1} parent=1 // loop_header
      %s31 = sphi 0, %s35
      %p32 = scmp.ge.s32.totalorder %s31, 6
      %s38 = sphi 0, %s50
      %s39 = sphi 0, %s46
      %s40 = sphi 0, %s38
      %s41 = sphi 0, %s39
      %s42 = sphi 0, %s40
      %s43 = sphi 0, %s41
      %s53 = sphi 0, %s55
      %s56 = sphi 0, %s53
      %s57 = sphi 0, %s56
      %s73 = sphi 0, %s57
      %s79 = sphi 0, %s81
      %s82 = sphi 0, %s79
      %s83 = sphi 0, %s82
      %s99 = sphi 0, %s83
      %s105 = sphi 0, %s107
      %s108 = sphi 0, %s105
      %s109 = sphi 0, %s108
      %s125 = sphi 0, %s109
      %s131 = sphi 0, %s133
      %s134 = sphi 0, %s131
      %s135 = sphi 0, %s134
      %s151 = sphi 0, %s135
      %s157 = sphi 0, %s159
      %s160 = sphi 0, %s157
      %s161 = sphi 0, %s160
      %s177 = sphi 0, %s161
      %s183 = sphi 0, %s185
      %s186 = sphi 0, %s183
      %s187 = sphi 0, %s186
      %s203 = sphi 0, %s187
      %s209 = sphi 0, %s211
      %s212 = sphi 0, %s209
      %s213 = sphi 0, %s212
      %s229 = sphi 0, %s213
      %s235 = sphi 0, %s237
      %s238 = sphi 0, %s235
      %s239 = sphi 0, %s238
      %s255 = sphi 0, %s239
      %s261 = sphi 0, %s263
      %s264 = sphi 0, %s261
      %s265 = sphi 0, %s264
      %s281 = sphi 0, %s265
      %s287 = sphi 0, %s289
      %s290 = sphi 0, %s287
      %s291 = sphi 0, %s290
      %s307 = sphi 0, %s291
      %s313 = sphi 0, %s315
      %s316 = sphi 0, %s313
      %s317 = sphi 0, %s316
      %s333 = sphi 0, %s317
      %s339 = sphi 0, %s341
      %s342 = sphi 0, %s339
      %s343 = sphi 0, %s342
      %s359 = sphi 0, %s343
      %s365 = sphi 0, %s367
      %s368 = sphi 0, %s365
      %s369 = sphi 0, %s368
      %s385 = sphi 0, %s369
      %s391 = sphi 0, %s393
      %s394 = sphi 0, %s391
      %s395 = sphi 0, %s394
      %s411 = sphi 0, %s395
      %s417 = sphi 0, %s419
      %s420 = sphi 0, %s417
      %s421 = sphi 0, %s420
      %s437 = sphi 0, %s421
      %s443 = sphi 0, %s445
      %s446 = sphi 0, %s443
      %s447 = sphi 0, %s446
      %s463 = sphi 0, %s447
      %s469 = sphi 0, %s471
      %s472 = sphi 0, %s469
      %s473 = sphi 0, %s472
      %s489 = sphi 0, %s473
      %s493 = sphi 0, %s493
      %s495 = sphi 0, %s493
      %s496 = sphi 0, %s495
      %s510 = sphi 0, %s496
      %s514 = sphi 0, %s514
      %s516 = sphi 0, %s514
      %s517 = sphi 0, %s516
      %s531 = sphi 0, %s517
      %s537 = sphi 0, %s539
      %s540 = sphi 0, %s537
      %s541 = sphi 0, %s540
      %s557 = sphi 0, %s541
    $region4: #{tpu_custom_call.1} parent=1 // loop_header_branch
      %34 = sbr.rel (%p32) target = $region8
    $region5: #{tpu_custom_call.1} parent=1 // loop_body
      %s36 = ssub.s32 %s31, 1
      %s37 = ssub.s32 %s31, 2
      %s44 = sadd.s32 1, %s39
      %p45 = scmp.ge.s32.totalorder %s44, 2
      %s46 = scalar_select %p45, 0, %s44
      %s47 = sadd.s32 1, %s38
      %s48 = scalar_select %p45, %s47, %s38
      %p49 = scmp.ge.s32.totalorder %s48, 2
      %s50 = scalar_select %p49, 0, %s48
      %s51 = ssub.s32 %s38, %s50
      %p52 = scmp.eq.s32.totalorder %s51, 0
      %s54 = sadd.s32 %s53, 1
      %s55 = scalar_select %p52, %s53, %s54
      %p58 = pneg %p52
      %p59 = scmp.eq.s32.totalorder %s31, 3
      %p60 = por %p58, %p59
      %p61 = scmp.ne.s32.totalorder %s53, %s56
      %p62 = scmp.eq.s32.totalorder %s31, 0
      %p63 = por %p61, %p62
      %p64 = scmp.ne.s32.totalorder %s53, %s56
      %p65 = scmp.eq.s32.totalorder %s36, 3
      %p66 = por %p64, %p65
      %p67 = scmp.ne.s32.totalorder %s56, %s57
      %p68 = scmp.eq.s32.totalorder %s36, 0
      %p69 = por %p67, %p68
      %p70 = scmp.ne.s32.totalorder %s56, %s57
      %p71 = scmp.eq.s32.totalorder %s37, 3
      %p72 = por %p70, %p71
      %p74 = scmp.ne.s32.totalorder %s57, %s73
      %p75 = scmp.eq.s32.totalorder %s37, 0
      %p76 = por %p74, %p75
      %s77 = ssub.s32 %s39, %s46
      %p78 = scmp.eq.s32.totalorder %s77, 0
      %s80 = sadd.s32 %s79, 1
      %s81 = scalar_select %p78, %s79, %s80
      %p84 = pneg %p78
      %p85 = scmp.eq.s32.totalorder %s31, 3
      %p86 = por %p84, %p85
      %p87 = scmp.ne.s32.totalorder %s79, %s82
      %p88 = scmp.eq.s32.totalorder %s31, 0
      %p89 = por %p87, %p88
      %p90 = scmp.ne.s32.totalorder %s79, %s82
      %p91 = scmp.eq.s32.totalorder %s36, 3
      %p92 = por %p90, %p91
      %p93 = scmp.ne.s32.totalorder %s82, %s83
      %p94 = scmp.eq.s32.totalorder %s36, 0
      %p95 = por %p93, %p94
      %p96 = scmp.ne.s32.totalorder %s82, %s83
      %p97 = scmp.eq.s32.totalorder %s37, 3
      %p98 = por %p96, %p97
      %p100 = scmp.ne.s32.totalorder %s83, %s99
      %p101 = scmp.eq.s32.totalorder %s37, 0
      %p102 = por %p100, %p101
      %s103 = ssub.s32 %s39, %s46
      %p104 = scmp.eq.s32.totalorder %s103, 0
      %s106 = sadd.s32 %s105, 1
      %s107 = scalar_select %p104, %s105, %s106
      %p110 = pneg %p104
      %p111 = scmp.eq.s32.totalorder %s31, 3
      %p112 = por %p110, %p111
      %p113 = scmp.ne.s32.totalorder %s105, %s108
      %p114 = scmp.eq.s32.totalorder %s31, 0
      %p115 = por %p113, %p114
      %p116 = scmp.ne.s32.totalorder %s105, %s108
      %p117 = scmp.eq.s32.totalorder %s36, 3
      %p118 = por %p116, %p117
      %p119 = scmp.ne.s32.totalorder %s108, %s109
      %p120 = scmp.eq.s32.totalorder %s36, 0
      %p121 = por %p119, %p120
      %p122 = scmp.ne.s32.totalorder %s108, %s109
      %p123 = scmp.eq.s32.totalorder %s37, 3
      %p124 = por %p122, %p123
      %p126 = scmp.ne.s32.totalorder %s109, %s125
      %p127 = scmp.eq.s32.totalorder %s37, 0
      %p128 = por %p126, %p127
      %s129 = ssub.s32 %s39, %s46
      %p130 = scmp.eq.s32.totalorder %s129, 0
      %s132 = sadd.s32 %s131, 1
      %s133 = scalar_select %p130, %s131, %s132
      %p136 = pneg %p130
      %p137 = scmp.eq.s32.totalorder %s31, 3
      %p138 = por %p136, %p137
      %p139 = scmp.ne.s32.totalorder %s131, %s134
      %p140 = scmp.eq.s32.totalorder %s31, 0
      %p141 = por %p139, %p140
      %p142 = scmp.ne.s32.totalorder %s131, %s134
      %p143 = scmp.eq.s32.totalorder %s36, 3
      %p144 = por %p142, %p143
      %p145 = scmp.ne.s32.totalorder %s134, %s135
      %p146 = scmp.eq.s32.totalorder %s36, 0
      %p147 = por %p145, %p146
      %p148 = scmp.ne.s32.totalorder %s134, %s135
      %p149 = scmp.eq.s32.totalorder %s37, 3
      %p150 = por %p148, %p149
      %p152 = scmp.ne.s32.totalorder %s135, %s151
      %p153 = scmp.eq.s32.totalorder %s37, 0
      %p154 = por %p152, %p153
      %s155 = ssub.s32 %s39, %s46
      %p156 = scmp.eq.s32.totalorder %s155, 0
      %s158 = sadd.s32 %s157, 1
      %s159 = scalar_select %p156, %s157, %s158
      %p162 = pneg %p156
      %p163 = scmp.eq.s32.totalorder %s31, 3
      %p164 = por %p162, %p163
      %p165 = scmp.ne.s32.totalorder %s157, %s160
      %p166 = scmp.eq.s32.totalorder %s31, 0
      %p167 = por %p165, %p166
      %p168 = scmp.ne.s32.totalorder %s157, %s160
      %p169 = scmp.eq.s32.totalorder %s36, 3
      %p170 = por %p168, %p169
      %p171 = scmp.ne.s32.totalorder %s160, %s161
      %p172 = scmp.eq.s32.totalorder %s36, 0
      %p173 = por %p171, %p172
      %p174 = scmp.ne.s32.totalorder %s160, %s161
      %p175 = scmp.eq.s32.totalorder %s37, 3
      %p176 = por %p174, %p175
      %p178 = scmp.ne.s32.totalorder %s161, %s177
      %p179 = scmp.eq.s32.totalorder %s37, 0
      %p180 = por %p178, %p179
      %s181 = ssub.s32 %s39, %s46
      %p182 = scmp.eq.s32.totalorder %s181, 0
      %s184 = sadd.s32 %s183, 1
      %s185 = scalar_select %p182, %s183, %s184
      %p188 = pneg %p182
      %p189 = scmp.eq.s32.totalorder %s31, 3
      %p190 = por %p188, %p189
      %p191 = scmp.ne.s32.totalorder %s183, %s186
      %p192 = scmp.eq.s32.totalorder %s31, 0
      %p193 = por %p191, %p192
      %p194 = scmp.ne.s32.totalorder %s183, %s186
      %p195 = scmp.eq.s32.totalorder %s36, 3
      %p196 = por %p194, %p195
      %p197 = scmp.ne.s32.totalorder %s186, %s187
      %p198 = scmp.eq.s32.totalorder %s36, 0
      %p199 = por %p197, %p198
      %p200 = scmp.ne.s32.totalorder %s186, %s187
      %p201 = scmp.eq.s32.totalorder %s37, 3
      %p202 = por %p200, %p201
      %p204 = scmp.ne.s32.totalorder %s187, %s203
      %p205 = scmp.eq.s32.totalorder %s37, 0
      %p206 = por %p204, %p205
      %s207 = ssub.s32 %s39, %s46
      %p208 = scmp.eq.s32.totalorder %s207, 0
      %s210 = sadd.s32 %s209, 1
      %s211 = scalar_select %p208, %s209, %s210
      %p214 = pneg %p208
      %p215 = scmp.eq.s32.totalorder %s31, 3
      %p216 = por %p214, %p215
      %p217 = scmp.ne.s32.totalorder %s209, %s212
      %p218 = scmp.eq.s32.totalorder %s31, 0
      %p219 = por %p217, %p218
      %p220 = scmp.ne.s32.totalorder %s209, %s212
      %p221 = scmp.eq.s32.totalorder %s36, 3
      %p222 = por %p220, %p221
      %p223 = scmp.ne.s32.totalorder %s212, %s213
      %p224 = scmp.eq.s32.totalorder %s36, 0
      %p225 = por %p223, %p224
      %p226 = scmp.ne.s32.totalorder %s212, %s213
      %p227 = scmp.eq.s32.totalorder %s37, 3
      %p228 = por %p226, %p227
      %p230 = scmp.ne.s32.totalorder %s213, %s229
      %p231 = scmp.eq.s32.totalorder %s37, 0
      %p232 = por %p230, %p231
      %s233 = ssub.s32 %s39, %s46
      %p234 = scmp.eq.s32.totalorder %s233, 0
      %s236 = sadd.s32 %s235, 1
      %s237 = scalar_select %p234, %s235, %s236
      %p240 = pneg %p234
      %p241 = scmp.eq.s32.totalorder %s31, 3
      %p242 = por %p240, %p241
      %p243 = scmp.ne.s32.totalorder %s235, %s238
      %p244 = scmp.eq.s32.totalorder %s31, 0
      %p245 = por %p243, %p244
      %p246 = scmp.ne.s32.totalorder %s235, %s238
      %p247 = scmp.eq.s32.totalorder %s36, 3
      %p248 = por %p246, %p247
      %p249 = scmp.ne.s32.totalorder %s238, %s239
      %p250 = scmp.eq.s32.totalorder %s36, 0
      %p251 = por %p249, %p250
      %p252 = scmp.ne.s32.totalorder %s238, %s239
      %p253 = scmp.eq.s32.totalorder %s37, 3
      %p254 = por %p252, %p253
      %p256 = scmp.ne.s32.totalorder %s239, %s255
      %p257 = scmp.eq.s32.totalorder %s37, 0
      %p258 = por %p256, %p257
      %s259 = ssub.s32 %s39, %s46
      %p260 = scmp.eq.s32.totalorder %s259, 0
      %s262 = sadd.s32 %s261, 1
      %s263 = scalar_select %p260, %s261, %s262
      %p266 = pneg %p260
      %p267 = scmp.eq.s32.totalorder %s31, 3
      %p268 = por %p266, %p267
      %p269 = scmp.ne.s32.totalorder %s261, %s264
      %p270 = scmp.eq.s32.totalorder %s31, 0
      %p271 = por %p269, %p270
      %p272 = scmp.ne.s32.totalorder %s261, %s264
      %p273 = scmp.eq.s32.totalorder %s36, 3
      %p274 = por %p272, %p273
      %p275 = scmp.ne.s32.totalorder %s264, %s265
      %p276 = scmp.eq.s32.totalorder %s36, 0
      %p277 = por %p275, %p276
      %p278 = scmp.ne.s32.totalorder %s264, %s265
      %p279 = scmp.eq.s32.totalorder %s37, 3
      %p280 = por %p278, %p279
      %p282 = scmp.ne.s32.totalorder %s265, %s281
      %p283 = scmp.eq.s32.totalorder %s37, 0
      %p284 = por %p282, %p283
      %s285 = ssub.s32 %s39, %s46
      %p286 = scmp.eq.s32.totalorder %s285, 0
      %s288 = sadd.s32 %s287, 1
      %s289 = scalar_select %p286, %s287, %s288
      %p292 = pneg %p286
      %p293 = scmp.eq.s32.totalorder %s31, 3
      %p294 = por %p292, %p293
      %p295 = scmp.ne.s32.totalorder %s287, %s290
      %p296 = scmp.eq.s32.totalorder %s31, 0
      %p297 = por %p295, %p296
      %p298 = scmp.ne.s32.totalorder %s287, %s290
      %p299 = scmp.eq.s32.totalorder %s36, 3
      %p300 = por %p298, %p299
      %p301 = scmp.ne.s32.totalorder %s290, %s291
      %p302 = scmp.eq.s32.totalorder %s36, 0
      %p303 = por %p301, %p302
      %p304 = scmp.ne.s32.totalorder %s290, %s291
      %p305 = scmp.eq.s32.totalorder %s37, 3
      %p306 = por %p304, %p305
      %p308 = scmp.ne.s32.totalorder %s291, %s307
      %p309 = scmp.eq.s32.totalorder %s37, 0
      %p310 = por %p308, %p309
      %s311 = ssub.s32 %s39, %s46
      %p312 = scmp.eq.s32.totalorder %s311, 0
      %s314 = sadd.s32 %s313, 1
      %s315 = scalar_select %p312, %s313, %s314
      %p318 = pneg %p312
      %p319 = scmp.eq.s32.totalorder %s31, 3
      %p320 = por %p318, %p319
      %p321 = scmp.ne.s32.totalorder %s313, %s316
      %p322 = scmp.eq.s32.totalorder %s31, 0
      %p323 = por %p321, %p322
      %p324 = scmp.ne.s32.totalorder %s313, %s316
      %p325 = scmp.eq.s32.totalorder %s36, 3
      %p326 = por %p324, %p325
      %p327 = scmp.ne.s32.totalorder %s316, %s317
      %p328 = scmp.eq.s32.totalorder %s36, 0
      %p329 = por %p327, %p328
      %p330 = scmp.ne.s32.totalorder %s316, %s317
      %p331 = scmp.eq.s32.totalorder %s37, 3
      %p332 = por %p330, %p331
      %p334 = scmp.ne.s32.totalorder %s317, %s333
      %p335 = scmp.eq.s32.totalorder %s37, 0
      %p336 = por %p334, %p335
      %s337 = ssub.s32 %s39, %s46
      %p338 = scmp.eq.s32.totalorder %s337, 0
      %s340 = sadd.s32 %s339, 1
      %s341 = scalar_select %p338, %s339, %s340
      %p344 = pneg %p338
      %p345 = scmp.eq.s32.totalorder %s31, 3
      %p346 = por %p344, %p345
      %p347 = scmp.ne.s32.totalorder %s339, %s342
      %p348 = scmp.eq.s32.totalorder %s31, 0
      %p349 = por %p347, %p348
      %p350 = scmp.ne.s32.totalorder %s339, %s342
      %p351 = scmp.eq.s32.totalorder %s36, 3
      %p352 = por %p350, %p351
      %p353 = scmp.ne.s32.totalorder %s342, %s343
      %p354 = scmp.eq.s32.totalorder %s36, 0
      %p355 = por %p353, %p354
      %p356 = scmp.ne.s32.totalorder %s342, %s343
      %p357 = scmp.eq.s32.totalorder %s37, 3
      %p358 = por %p356, %p357
      %p360 = scmp.ne.s32.totalorder %s343, %s359
      %p361 = scmp.eq.s32.totalorder %s37, 0
      %p362 = por %p360, %p361
      %s363 = ssub.s32 %s39, %s46
      %p364 = scmp.eq.s32.totalorder %s363, 0
      %s366 = sadd.s32 %s365, 1
      %s367 = scalar_select %p364, %s365, %s366
      %p370 = pneg %p364
      %p371 = scmp.eq.s32.totalorder %s31, 3
      %p372 = por %p370, %p371
      %p373 = scmp.ne.s32.totalorder %s365, %s368
      %p374 = scmp.eq.s32.totalorder %s31, 0
      %p375 = por %p373, %p374
      %p376 = scmp.ne.s32.totalorder %s365, %s368
      %p377 = scmp.eq.s32.totalorder %s36, 3
      %p378 = por %p376, %p377
      %p379 = scmp.ne.s32.totalorder %s368, %s369
      %p380 = scmp.eq.s32.totalorder %s36, 0
      %p381 = por %p379, %p380
      %p382 = scmp.ne.s32.totalorder %s368, %s369
      %p383 = scmp.eq.s32.totalorder %s37, 3
      %p384 = por %p382, %p383
      %p386 = scmp.ne.s32.totalorder %s369, %s385
      %p387 = scmp.eq.s32.totalorder %s37, 0
      %p388 = por %p386, %p387
      %s389 = ssub.s32 %s39, %s46
      %p390 = scmp.eq.s32.totalorder %s389, 0
      %s392 = sadd.s32 %s391, 1
      %s393 = scalar_select %p390, %s391, %s392
      %p396 = pneg %p390
      %p397 = scmp.eq.s32.totalorder %s31, 3
      %p398 = por %p396, %p397
      %p399 = scmp.ne.s32.totalorder %s391, %s394
      %p400 = scmp.eq.s32.totalorder %s31, 0
      %p401 = por %p399, %p400
      %p402 = scmp.ne.s32.totalorder %s391, %s394
      %p403 = scmp.eq.s32.totalorder %s36, 3
      %p404 = por %p402, %p403
      %p405 = scmp.ne.s32.totalorder %s394, %s395
      %p406 = scmp.eq.s32.totalorder %s36, 0
      %p407 = por %p405, %p406
      %p408 = scmp.ne.s32.totalorder %s394, %s395
      %p409 = scmp.eq.s32.totalorder %s37, 3
      %p410 = por %p408, %p409
      %p412 = scmp.ne.s32.totalorder %s395, %s411
      %p413 = scmp.eq.s32.totalorder %s37, 0
      %p414 = por %p412, %p413
      %s415 = ssub.s32 %s39, %s46
      %p416 = scmp.eq.s32.totalorder %s415, 0
      %s418 = sadd.s32 %s417, 1
      %s419 = scalar_select %p416, %s417, %s418
      %p422 = pneg %p416
      %p423 = scmp.eq.s32.totalorder %s31, 3
      %p424 = por %p422, %p423
      %p425 = scmp.ne.s32.totalorder %s417, %s420
      %p426 = scmp.eq.s32.totalorder %s31, 0
      %p427 = por %p425, %p426
      %p428 = scmp.ne.s32.totalorder %s417, %s420
      %p429 = scmp.eq.s32.totalorder %s36, 3
      %p430 = por %p428, %p429
      %p431 = scmp.ne.s32.totalorder %s420, %s421
      %p432 = scmp.eq.s32.totalorder %s36, 0
      %p433 = por %p431, %p432
      %p434 = scmp.ne.s32.totalorder %s420, %s421
      %p435 = scmp.eq.s32.totalorder %s37, 3
      %p436 = por %p434, %p435
      %p438 = scmp.ne.s32.totalorder %s421, %s437
      %p439 = scmp.eq.s32.totalorder %s37, 0
      %p440 = por %p438, %p439
      %s441 = ssub.s32 %s39, %s46
      %p442 = scmp.eq.s32.totalorder %s441, 0
      %s444 = sadd.s32 %s443, 1
      %s445 = scalar_select %p442, %s443, %s444
      %p448 = pneg %p442
      %p449 = scmp.eq.s32.totalorder %s31, 3
      %p450 = por %p448, %p449
      %p451 = scmp.ne.s32.totalorder %s443, %s446
      %p452 = scmp.eq.s32.totalorder %s31, 0
      %p453 = por %p451, %p452
      %p454 = scmp.ne.s32.totalorder %s443, %s446
      %p455 = scmp.eq.s32.totalorder %s36, 3
      %p456 = por %p454, %p455
      %p457 = scmp.ne.s32.totalorder %s446, %s447
      %p458 = scmp.eq.s32.totalorder %s36, 0
      %p459 = por %p457, %p458
      %p460 = scmp.ne.s32.totalorder %s446, %s447
      %p461 = scmp.eq.s32.totalorder %s37, 3
      %p462 = por %p460, %p461
      %p464 = scmp.ne.s32.totalorder %s447, %s463
      %p465 = scmp.eq.s32.totalorder %s37, 0
      %p466 = por %p464, %p465
      %s467 = ssub.s32 %s39, %s46
      %p468 = scmp.eq.s32.totalorder %s467, 0
      %s470 = sadd.s32 %s469, 1
      %s471 = scalar_select %p468, %s469, %s470
      %p474 = pneg %p468
      %p475 = scmp.eq.s32.totalorder %s31, 3
      %p476 = por %p474, %p475
      %p477 = scmp.ne.s32.totalorder %s469, %s472
      %p478 = scmp.eq.s32.totalorder %s31, 0
      %p479 = por %p477, %p478
      %p480 = scmp.ne.s32.totalorder %s469, %s472
      %p481 = scmp.eq.s32.totalorder %s36, 3
      %p482 = por %p480, %p481
      %p483 = scmp.ne.s32.totalorder %s472, %s473
      %p484 = scmp.eq.s32.totalorder %s36, 0
      %p485 = por %p483, %p484
      %p486 = scmp.ne.s32.totalorder %s472, %s473
      %p487 = scmp.eq.s32.totalorder %s37, 3
      %p488 = por %p486, %p487
      %p490 = scmp.ne.s32.totalorder %s473, %s489
      %p491 = scmp.eq.s32.totalorder %s37, 0
      %p492 = por %p490, %p491
      %s494 = sadd.s32 %s493, 1
      %p497 = scmp.eq.s32.totalorder %s31, 3
      %p498 = scmp.ne.s32.totalorder %s493, %s495
      %p499 = scmp.eq.s32.totalorder %s31, 0
      %p500 = por %p498, %p499
      %p501 = scmp.ne.s32.totalorder %s493, %s495
      %p502 = scmp.eq.s32.totalorder %s36, 3
      %p503 = por %p501, %p502
      %p504 = scmp.ne.s32.totalorder %s495, %s496
      %p505 = scmp.eq.s32.totalorder %s36, 0
      %p506 = por %p504, %p505
      %p507 = scmp.ne.s32.totalorder %s495, %s496
      %p508 = scmp.eq.s32.totalorder %s37, 3
      %p509 = por %p507, %p508
      %p511 = scmp.ne.s32.totalorder %s496, %s510
      %p512 = scmp.eq.s32.totalorder %s37, 0
      %p513 = por %p511, %p512
      %s515 = sadd.s32 %s514, 1
      %p518 = scmp.eq.s32.totalorder %s31, 3
      %p519 = scmp.ne.s32.totalorder %s514, %s516
      %p520 = scmp.eq.s32.totalorder %s31, 0
      %p521 = por %p519, %p520
      %p522 = scmp.ne.s32.totalorder %s514, %s516
      %p523 = scmp.eq.s32.totalorder %s36, 3
      %p524 = por %p522, %p523
      %p525 = scmp.ne.s32.totalorder %s516, %s517
      %p526 = scmp.eq.s32.totalorder %s36, 0
      %p527 = por %p525, %p526
      %p528 = scmp.ne.s32.totalorder %s516, %s517
      %p529 = scmp.eq.s32.totalorder %s37, 3
      %p530 = por %p528, %p529
      %p532 = scmp.ne.s32.totalorder %s517, %s531
      %p533 = scmp.eq.s32.totalorder %s37, 0
      %p534 = por %p532, %p533
      %s535 = ssub.s32 %s38, %s50
      %p536 = scmp.eq.s32.totalorder %s535, 0
      %s538 = sadd.s32 %s537, 1
      %s539 = scalar_select %p536, %s537, %s538
      %p542 = pneg %p536
      %p543 = scmp.eq.s32.totalorder %s31, 3
      %p544 = por %p542, %p543
      %p545 = scmp.ne.s32.totalorder %s537, %s540
      %p546 = scmp.eq.s32.totalorder %s31, 0
      %p547 = por %p545, %p546
      %p548 = scmp.ne.s32.totalorder %s537, %s540
      %p549 = scmp.eq.s32.totalorder %s36, 3
      %p550 = por %p548, %p549
      %p551 = scmp.ne.s32.totalorder %s540, %s541
      %p552 = scmp.eq.s32.totalorder %s36, 0
      %p553 = por %p551, %p552
      %p554 = scmp.ne.s32.totalorder %s540, %s541
      %p555 = scmp.eq.s32.totalorder %s37, 3
      %p556 = por %p554, %p555
      %p558 = scmp.ne.s32.totalorder %s541, %s557
      %p559 = scmp.eq.s32.totalorder %s37, 0
      %p560 = por %p558, %p559
      %p561 = scmp.le.s32.totalorder 1, %s31
      %p562 = scmp.lt.s32.totalorder %s31, 5
      %p563 = pnand %p561, %p562
      %p564 = pneg %p563
      // Predicated region
      $region9: #{tpu_custom_call.1} parent=5 // pred_check
        _
      $region10: #{tpu_custom_call.1} parent=5 // pred_check_branch
        %566 = sbr.rel (%p563) target = $region12
      $region11: #{tpu_custom_call.1} parent=5 // pred_region
        %s567 = ssub.s32 %s31, 1
        // Predicated region
        $region13: #{tpu_custom_call.1} parent=11 // pred_check
          %p568 = pneg %p506
        $region14: #{tpu_custom_call.1} parent=11 // pred_check_branch
          %570 = sbr.rel (%p568) target = $region16
        $region15: #{tpu_custom_call.1} parent=11 // pred_region
          _
        $region16: #{tpu_custom_call.1} parent=11 // pred_fallthru
          _
        // Predicated region
        $region17: #{tpu_custom_call.1} parent=11 // pred_check
          %p571 = pneg %p527
        $region18: #{tpu_custom_call.1} parent=11 // pred_check_branch
          %573 = sbr.rel (%p571) target = $region20
        $region19: #{tpu_custom_call.1} parent=11 // pred_region
          _
        $region20: #{tpu_custom_call.1} parent=11 // pred_fallthru
          _
      $region12: #{tpu_custom_call.1} parent=5 // pred_fallthru
        _
      %p574 = scmp.lt.s32.totalorder %s31, 4
      // Predicated region
      $region21: #{tpu_custom_call.1} parent=5 // pred_check
        %p575 = pneg %p574
      $region22: #{tpu_custom_call.1} parent=5 // pred_check_branch
        %577 = sbr.rel (%p575) target = $region24
      $region23: #{tpu_custom_call.1} parent=5 // pred_region
        // Predicated region
        $region25: #{tpu_custom_call.1} parent=23 // pred_check
          %p578 = pneg %p63
        $region26: #{tpu_custom_call.1} parent=23 // pred_check_branch
          %580 = sbr.rel (%p578) target = $region28
        $region27: #{tpu_custom_call.1} parent=23 // pred_region
          %s581 = sand.u32 %s53, 1
          %s582 = scalar_lea.sflag [#allocation4], %s581
          %s583 = sand.u32 %s53, 1
          %s584 = smul.addr %s583, 8
          %s585 = scalar_lea.vmem [#allocation3], %s584
          %s587 = ssub.s32 128, 128
          %588 = vsyncadd %s582, %s587
          %s589 = smul.addr %s38, 128
          %s590 = scalar_lea.hbm %s0, %s589
          %s592 = sshll.u32 %s585, 4
          %s593 = int_to_ptr.vmem [resolvable:$true] %s592
          %595 = dma.hbm_to_vmem [thread:$0]  %s590, 128, %s593, %s582
        $region28: #{tpu_custom_call.1} parent=23 // pred_fallthru
          _
        // Predicated region
        $region29: #{tpu_custom_call.1} parent=23 // pred_check
          %p596 = pneg %p89
        $region30: #{tpu_custom_call.1} parent=23 // pred_check_branch
          %598 = sbr.rel (%p596) target = $region32
        $region31: #{tpu_custom_call.1} parent=23 // pred_region
          %p599 = scmp.lt.s32.totalorder %s39, 1
          %s600 = scalar_select %p599, %s39, 1
          %s601 = scalar_lea.vmem %s1, %s600
        $region32: #{tpu_custom_call.1} parent=23 // pred_fallthru
          _
        // Predicated region
        $region33: #{tpu_custom_call.1} parent=23 // pred_check
          %p602 = pneg %p115
        $region34: #{tpu_custom_call.1} parent=23 // pred_check_branch
          %604 = sbr.rel (%p602) target = $region36
        $region35: #{tpu_custom_call.1} parent=23 // pred_region
          %p605 = scmp.lt.s32.totalorder %s39, 1
          %s606 = scalar_select %p605, %s39, 1
          %s607 = scalar_lea.vmem %s2, %s606
        $region36: #{tpu_custom_call.1} parent=23 // pred_fallthru
          _
        // Predicated region
        $region37: #{tpu_custom_call.1} parent=23 // pred_check
          %p608 = pneg %p141
        $region38: #{tpu_custom_call.1} parent=23 // pred_check_branch
          %610 = sbr.rel (%p608) target = $region40
        $region39: #{tpu_custom_call.1} parent=23 // pred_region
          %p611 = scmp.lt.s32.totalorder %s39, 1
          %s612 = scalar_select %p611, %s39, 1
          %s613 = smul.addr %s612, 4
          %s614 = smul.addr %s613, 4
          %s615 = scalar_lea.vmem %s3, %s614
        $region40: #{tpu_custom_call.1} parent=23 // pred_fallthru
          _
        // Predicated region
        $region41: #{tpu_custom_call.1} parent=23 // pred_check
          %p616 = pneg %p167
        $region42: #{tpu_custom_call.1} parent=23 // pred_check_branch
          %618 = sbr.rel (%p616) target = $region44
        $region43: #{tpu_custom_call.1} parent=23 // pred_region
          %p619 = scmp.lt.s32.totalorder %s39, 1
          %s620 = scalar_select %p619, %s39, 1
          %s621 = scalar_lea.vmem %s4, %s620
        $region44: #{tpu_custom_call.1} parent=23 // pred_fallthru
          _
        // Predicated region
        $region45: #{tpu_custom_call.1} parent=23 // pred_check
          %p622 = pneg %p193
        $region46: #{tpu_custom_call.1} parent=23 // pred_check_branch
          %624 = sbr.rel (%p622) target = $region48
        $region47: #{tpu_custom_call.1} parent=23 // pred_region
          %p625 = scmp.lt.s32.totalorder %s39, 1
          %s626 = scalar_select %p625, %s39, 1
          %s627 = smul.addr %s626, 4
          %s628 = smul.addr %s627, 4
          %s629 = scalar_lea.vmem %s5, %s628
        $region48: #{tpu_custom_call.1} parent=23 // pred_fallthru
          _
        // Predicated region
        $region49: #{tpu_custom_call.1} parent=23 // pred_check
          %p630 = pneg %p219
        $region50: #{tpu_custom_call.1} parent=23 // pred_check_branch
          %632 = sbr.rel (%p630) target = $region52
        $region51: #{tpu_custom_call.1} parent=23 // pred_region
          %p633 = scmp.lt.s32.totalorder %s39, 1
          %s634 = scalar_select %p633, %s39, 1
          %s635 = scalar_lea.vmem %s6, %s634
        $region52: #{tpu_custom_call.1} parent=23 // pred_fallthru
          _
        // Predicated region
        $region53: #{tpu_custom_call.1} parent=23 // pred_check
          %p636 = pneg %p245
        $region54: #{tpu_custom_call.1} parent=23 // pred_check_branch
          %638 = sbr.rel (%p636) target = $region56
        $region55: #{tpu_custom_call.1} parent=23 // pred_region
          %p639 = scmp.lt.s32.totalorder %s39, 1
          %s640 = scalar_select %p639, %s39, 1
          %s641 = smul.addr %s640, 4
          %s642 = smul.addr %s641, 4
          %s643 = scalar_lea.vmem %s7, %s642
        $region56: #{tpu_custom_call.1} parent=23 // pred_fallthru
          _
        // Predicated region
        $region57: #{tpu_custom_call.1} parent=23 // pred_check
          %p644 = pneg %p271
        $region58: #{tpu_custom_call.1} parent=23 // pred_check_branch
          %646 = sbr.rel (%p644) target = $region60
        $region59: #{tpu_custom_call.1} parent=23 // pred_region
          %p647 = scmp.lt.s32.totalorder %s39, 1
          %s648 = scalar_select %p647, %s39, 1
          %s649 = scalar_lea.vmem %s8, %s648
        $region60: #{tpu_custom_call.1} parent=23 // pred_fallthru
          _
        // Predicated region
        $region61: #{tpu_custom_call.1} parent=23 // pred_check
          %p650 = pneg %p297
        $region62: #{tpu_custom_call.1} parent=23 // pred_check_branch
          %652 = sbr.rel (%p650) target = $region64
        $region63: #{tpu_custom_call.1} parent=23 // pred_region
          %p653 = scmp.lt.s32.totalorder %s39, 1
          %s654 = scalar_select %p653, %s39, 1
          %s655 = smul.addr %s654, 4
          %s656 = smul.addr %s655, 4
          %s657 = scalar_lea.vmem %s9, %s656
        $region64: #{tpu_custom_call.1} parent=23 // pred_fallthru
          _
        // Predicated region
        $region65: #{tpu_custom_call.1} parent=23 // pred_check
          %p658 = pneg %p323
        $region66: #{tpu_custom_call.1} parent=23 // pred_check_branch
          %660 = sbr.rel (%p658) target = $region68
        $region67: #{tpu_custom_call.1} parent=23 // pred_region
          %p661 = scmp.lt.s32.totalorder %s39, 1
          %s662 = scalar_select %p661, %s39, 1
          %s663 = scalar_lea.vmem %s10, %s662
        $region68: #{tpu_custom_call.1} parent=23 // pred_fallthru
          _
        // Predicated region
        $region69: #{tpu_custom_call.1} parent=23 // pred_check
          %p664 = pneg %p349
        $region70: #{tpu_custom_call.1} parent=23 // pred_check_branch
          %666 = sbr.rel (%p664) target = $region72
        $region71: #{tpu_custom_call.1} parent=23 // pred_region
          %p667 = scmp.lt.s32.totalorder %s39, 1
          %s668 = scalar_select %p667, %s39, 1
          %s669 = scalar_lea.vmem %s11, %s668
        $region72: #{tpu_custom_call.1} parent=23 // pred_fallthru
          _
        // Predicated region
        $region73: #{tpu_custom_call.1} parent=23 // pred_check
          %p670 = pneg %p375
        $region74: #{tpu_custom_call.1} parent=23 // pred_check_branch
          %672 = sbr.rel (%p670) target = $region76
        $region75: #{tpu_custom_call.1} parent=23 // pred_region
          %p673 = scmp.lt.s32.totalorder %s39, 1
          %s674 = scalar_select %p673, %s39, 1
          %s675 = scalar_lea.vmem %s12, %s674
        $region76: #{tpu_custom_call.1} parent=23 // pred_fallthru
          _
        // Predicated region
        $region77: #{tpu_custom_call.1} parent=23 // pred_check
          %p676 = pneg %p401
        $region78: #{tpu_custom_call.1} parent=23 // pred_check_branch
          %678 = sbr.rel (%p676) target = $region80
        $region79: #{tpu_custom_call.1} parent=23 // pred_region
          %p679 = scmp.lt.s32.totalorder %s39, 1
          %s680 = scalar_select %p679, %s39, 1
          %s681 = smul.addr %s680, 4
          %s682 = smul.addr %s681, 4
          %s683 = scalar_lea.vmem %s13, %s682
        $region80: #{tpu_custom_call.1} parent=23 // pred_fallthru
          _
        // Predicated region
        $region81: #{tpu_custom_call.1} parent=23 // pred_check
          %p684 = pneg %p427
        $region82: #{tpu_custom_call.1} parent=23 // pred_check_branch
          %686 = sbr.rel (%p684) target = $region84
        $region83: #{tpu_custom_call.1} parent=23 // pred_region
          %p687 = scmp.lt.s32.totalorder %s39, 1
          %s688 = scalar_select %p687, %s39, 1
          %s689 = scalar_lea.vmem %s14, %s688
        $region84: #{tpu_custom_call.1} parent=23 // pred_fallthru
          _
        // Predicated region
        $region85: #{tpu_custom_call.1} parent=23 // pred_check
          %p690 = pneg %p453
        $region86: #{tpu_custom_call.1} parent=23 // pred_check_branch
          %692 = sbr.rel (%p690) target = $region88
        $region87: #{tpu_custom_call.1} parent=23 // pred_region
          %p693 = scmp.lt.s32.totalorder %s39, 1
          %s694 = scalar_select %p693, %s39, 1
          %s695 = smul.addr %s694, 16
          %s696 = smul.addr %s695, 4
          %s697 = scalar_lea.vmem %s15, %s696
        $region88: #{tpu_custom_call.1} parent=23 // pred_fallthru
          _
        // Predicated region
        $region89: #{tpu_custom_call.1} parent=23 // pred_check
          %p698 = pneg %p479
        $region90: #{tpu_custom_call.1} parent=23 // pred_check_branch
          %700 = sbr.rel (%p698) target = $region92
        $region91: #{tpu_custom_call.1} parent=23 // pred_region
          %p701 = scmp.lt.s32.totalorder %s39, 1
          %s702 = scalar_select %p701, %s39, 1
          %s703 = scalar_lea.vmem %s16, %s702
        $region92: #{tpu_custom_call.1} parent=23 // pred_fallthru
          _
      $region24: #{tpu_custom_call.1} parent=5 // pred_fallthru
        _
      %p704 = scmp.le.s32.totalorder 1, %s31
      %p705 = scmp.lt.s32.totalorder %s31, 5
      %p706 = pnand %p704, %p705
      %p707 = pneg %p706
      // Predicated region
      $region93: #{tpu_custom_call.1} parent=5 // pred_check
        _
      $region94: #{tpu_custom_call.1} parent=5 // pred_check_branch
        %709 = sbr.rel (%p706) target = $region96
      $region95: #{tpu_custom_call.1} parent=5 // pred_region
        %s710 = ssub.s32 %s31, 1
        %s711 = sand.u32 %s56, 1
        %s712 = scalar_lea.sflag [#allocation4], %s711
        %s713 = sand.u32 %s56, 1
        %s714 = smul.addr %s713, 8
        %s715 = scalar_lea.vmem [#allocation3], %s714
        // Predicated region
        $region97: #{tpu_custom_call.1} parent=95 // pred_check
          %p716 = pneg %p69
        $region98: #{tpu_custom_call.1} parent=95 // pred_check_branch
          %718 = sbr.rel (%p716) target = $region100
        $region99: #{tpu_custom_call.1} parent=95 // pred_region
          %719 = dma.done %s712, 128
        $region100: #{tpu_custom_call.1} parent=95 // pred_fallthru
          _
        %s720 = sand.u32 %s56, 1
        %s721 = scalar_lea.sflag [#allocation4], %s720
        %s722 = sand.u32 %s56, 1
        %s723 = smul.addr %s722, 8
        %s724 = scalar_lea.vmem [#allocation3], %s723
        %p725 = pneg %p69
        %p726 = pneg %p66
        %p727 = scmp.lt.s32.totalorder %s41, 1
        %s728 = scalar_select %p727, %s41, 1
        %s729 = scalar_lea.vmem %s1, %s728
        %p730 = pneg %p95
        %p731 = pneg %p92
        %p732 = scmp.lt.s32.totalorder %s41, 1
        %s733 = scalar_select %p732, %s41, 1
        %s734 = scalar_lea.vmem %s2, %s733
        %p735 = pneg %p121
        %p736 = pneg %p118
        %p737 = scmp.lt.s32.totalorder %s41, 1
        %s738 = scalar_select %p737, %s41, 1
        %s739 = smul.addr %s738, 4
        %s740 = smul.addr %s739, 4
        %s741 = scalar_lea.vmem %s3, %s740
        %p742 = pneg %p147
        %p743 = pneg %p144
        %p744 = scmp.lt.s32.totalorder %s41, 1
        %s745 = scalar_select %p744, %s41, 1
        %s746 = scalar_lea.vmem %s4, %s745
        %p747 = pneg %p173
        %p748 = pneg %p170
        %p749 = scmp.lt.s32.totalorder %s41, 1
        %s750 = scalar_select %p749, %s41, 1
        %s751 = smul.addr %s750, 4
        %s752 = smul.addr %s751, 4
        %s753 = scalar_lea.vmem %s5, %s752
        %p754 = pneg %p199
        %p755 = pneg %p196
        %p756 = scmp.lt.s32.totalorder %s41, 1
        %s757 = scalar_select %p756, %s41, 1
        %s758 = scalar_lea.vmem %s6, %s757
        %p759 = pneg %p225
        %p760 = pneg %p222
        %p761 = scmp.lt.s32.totalorder %s41, 1
        %s762 = scalar_select %p761, %s41, 1
        %s763 = smul.addr %s762, 4
        %s764 = smul.addr %s763, 4
        %s765 = scalar_lea.vmem %s7, %s764
        %p766 = pneg %p251
        %p767 = pneg %p248
        %p768 = scmp.lt.s32.totalorder %s41, 1
        %s769 = scalar_select %p768, %s41, 1
        %s770 = scalar_lea.vmem %s8, %s769
        %p771 = pneg %p277
        %p772 = pneg %p274
        %p773 = scmp.lt.s32.totalorder %s41, 1
        %s774 = scalar_select %p773, %s41, 1
        %s775 = smul.addr %s774, 4
        %s776 = smul.addr %s775, 4
        %s777 = scalar_lea.vmem %s9, %s776
        %p778 = pneg %p303
        %p779 = pneg %p300
        %p780 = scmp.lt.s32.totalorder %s41, 1
        %s781 = scalar_select %p780, %s41, 1
        %s782 = scalar_lea.vmem %s10, %s781
        %p783 = pneg %p329
        %p784 = pneg %p326
        %p785 = scmp.lt.s32.totalorder %s41, 1
        %s786 = scalar_select %p785, %s41, 1
        %s787 = scalar_lea.vmem %s11, %s786
        %p788 = pneg %p355
        %p789 = pneg %p352
        %p790 = scmp.lt.s32.totalorder %s41, 1
        %s791 = scalar_select %p790, %s41, 1
        %s792 = scalar_lea.vmem %s12, %s791
        %p793 = pneg %p381
        %p794 = pneg %p378
        %p795 = scmp.lt.s32.totalorder %s41, 1
        %s796 = scalar_select %p795, %s41, 1
        %s797 = smul.addr %s796, 4
        %s798 = smul.addr %s797, 4
        %s799 = scalar_lea.vmem %s13, %s798
        %p800 = pneg %p407
        %p801 = pneg %p404
        %p802 = scmp.lt.s32.totalorder %s41, 1
        %s803 = scalar_select %p802, %s41, 1
        %s804 = scalar_lea.vmem %s14, %s803
        %p805 = pneg %p433
        %p806 = pneg %p430
        %p807 = scmp.lt.s32.totalorder %s41, 1
        %s808 = scalar_select %p807, %s41, 1
        %s809 = smul.addr %s808, 16
        %s810 = smul.addr %s809, 4
        %s811 = scalar_lea.vmem %s15, %s810
        %p812 = pneg %p459
        %p813 = pneg %p456
        %p814 = scmp.lt.s32.totalorder %s41, 1
        %s815 = scalar_select %p814, %s41, 1
        %s816 = scalar_lea.vmem %s16, %s815
        %p817 = pneg %p485
        %p818 = pneg %p482
        %p819 = pneg %p506
        %p820 = pneg %p503
        %p821 = pneg %p527
        %p822 = pneg %p524
        %p823 = pneg %p553
        %p824 = pneg %p550
        %s825 = sand.u32 %s540, 1
        %s826 = scalar_lea.sflag [#allocation5], %s825
        %s827 = sand.u32 %s540, 1
        %s828 = smul.addr %s827, 8
        %s829 = scalar_lea.vmem [#allocation6], %s828
        %p830 = scmp.lt.s32.totalorder %s41, 1
        %s831 = scalar_select %p830, %s41, 1
        %s832 = scalar_lea.vmem %s1, %s831
        %p833 = scmp.lt.s32.totalorder %s41, 1
        %s834 = scalar_select %p833, %s41, 1
        %s835 = scalar_lea.vmem %s2, %s834
        %p836 = scmp.lt.s32.totalorder %s41, 1
        %s837 = scalar_select %p836, %s41, 1
        %s838 = smul.addr %s837, 4
        %s839 = smul.addr %s838, 4
        %s840 = scalar_lea.vmem %s3, %s839
        %p841 = scmp.lt.s32.totalorder %s41, 1
        %s842 = scalar_select %p841, %s41, 1
        %s843 = scalar_lea.vmem %s4, %s842
        %p844 = scmp.lt.s32.totalorder %s41, 1
        %s845 = scalar_select %p844, %s41, 1
        %s846 = smul.addr %s845, 4
        %s847 = smul.addr %s846, 4
        %s848 = scalar_lea.vmem %s5, %s847
        %p849 = scmp.lt.s32.totalorder %s41, 1
        %s850 = scalar_select %p849, %s41, 1
        %s851 = scalar_lea.vmem %s6, %s850
        %p852 = scmp.lt.s32.totalorder %s41, 1
        %s853 = scalar_select %p852, %s41, 1
        %s854 = smul.addr %s853, 4
        %s855 = smul.addr %s854, 4
        %s856 = scalar_lea.vmem %s7, %s855
        %p857 = scmp.lt.s32.totalorder %s41, 1
        %s858 = scalar_select %p857, %s41, 1
        %s859 = scalar_lea.vmem %s8, %s858
        %p860 = scmp.lt.s32.totalorder %s41, 1
        %s861 = scalar_select %p860, %s41, 1
        %s862 = smul.addr %s861, 4
        %s863 = smul.addr %s862, 4
        %s864 = scalar_lea.vmem %s9, %s863
        %p865 = scmp.lt.s32.totalorder %s41, 1
        %s866 = scalar_select %p865, %s41, 1
        %s867 = scalar_lea.vmem %s10, %s866
        %p868 = scmp.lt.s32.totalorder %s41, 1
        %s869 = scalar_select %p868, %s41, 1
        %s870 = scalar_lea.vmem %s11, %s869
        %p871 = scmp.lt.s32.totalorder %s41, 1
        %s872 = scalar_select %p871, %s41, 1
        %s873 = scalar_lea.vmem %s12, %s872
        %p874 = scmp.lt.s32.totalorder %s41, 1
        %s875 = scalar_select %p874, %s41, 1
        %s876 = smul.addr %s875, 4
        %s877 = smul.addr %s876, 4
        %s878 = scalar_lea.vmem %s13, %s877
        %p879 = scmp.lt.s32.totalorder %s41, 1
        %s880 = scalar_select %p879, %s41, 1
        %s881 = scalar_lea.vmem %s14, %s880
        %p882 = scmp.lt.s32.totalorder %s41, 1
        %s883 = scalar_select %p882, %s41, 1
        %s884 = smul.addr %s883, 16
        %s885 = smul.addr %s884, 4
        %s886 = scalar_lea.vmem %s15, %s885
        %p887 = scmp.lt.s32.totalorder %s41, 1
        %s888 = scalar_select %p887, %s41, 1
        %s889 = scalar_lea.vmem %s16, %s888
        %p891 = scmp.eq.s32.totalorder %s41, 0
        // Predicated region
        $region101: #{tpu_custom_call.1} parent=95 // pred_check
          %p892 = pneg %p891
        $region102: #{tpu_custom_call.1} parent=95 // pred_check_branch
          %894 = sbr.rel (%p892) target = $region104
        $region103: #{tpu_custom_call.1} parent=95 // pred_region
          %v895 = vld [vmem:[%s715] sm:$0xff]
          %vm896 = vcmask 261120
          %897 = vst.msk [vmem:[#allocation2] sm:$0xff] %vm896, %v895
        $region104: #{tpu_custom_call.1} parent=95 // pred_fallthru
          _
        %v898 = vld [vmem:[#allocation2] sm:$0xff]
        %v899 = vld [vmem:[%s832] sm:$0x1]
        %v900 = vld [vmem:[%s835] sm:$0x1]
        %vm901 = vcmask 261120
        %v902 = vsel %vm901, %v898, 0.0
        %903 = vadd.xlane.f32.xlu0 %v902
        %v904 = vpop.xlane.xlu0 %903
        %v905 = vrcp.pop 32.0
        %v906 = vmul.f32 %v904, %v905
        %v907 = vsub.f32 %v898, %v906
        %v908 = vmul.f32 %v907, %v907
        %v909 = vsel %vm901, %v908, 0.0
        %910 = vadd.xlane.f32.xlu0 %v909
        %v911 = vpop.xlane.xlu0 %910
        %v912 = vmul.f32 %v911, %v905
        %v913 = vadd.f32 %v912, 1e-05
        %v914 = vrsqrt.pop %v913
        %v915 = vmul.f32 %v907, %v914
        %v917 = vlaneseq
        %v918 = vshrl.u32 %v917, 7
        %v919 = vsub.s32 0, %v918
        %v920 = vrot.slane %v899, %v919
        %v922 = vmul.f32 %v915, %v920
        %v924 = vlaneseq
        %v925 = vshrl.u32 %v924, 7
        %v926 = vsub.s32 0, %v925
        %v927 = vrot.slane %v900, %v926
        %v929 = vadd.f32 %v922, %v927
        %v930 = vpack.c.bf16 %v929, %v929
        %v931 = vld [vmem:[%s840] sm:$0xf]
        %v932 = vld [vmem:[%s840 + $0x4] sm:$0xf]
        %v933 = vld [vmem:[%s840 + $0x8] sm:$0xf]
        %v934 = vld [vmem:[%s840 + $0xc] sm:$0xf]
        %v935 = vld [vmem:[%s843] sm:$0x1]
        %v937 = vlaneseq
        %v938 = vshrl.u32 %v937, 7
        %v939 = vsub.s32 0, %v938
        %v940 = vrot.slane %v935, %v939
        %v946 = vunpack.c.l.b16 %v931
        %v947 = vunpack.c.l.b16 %v932
        %v948 = vunpack.c.l.b16 %v933
        %v949 = vunpack.c.l.b16 %v934
        %v950 = vpack.c.b16 %v947, %v946
        %v951 = vpack.c.b16 %v949, %v948
        %v955 = vsel %vm901, %v930, 0
        %957 = vmatprep.subr.bf16.mxu0 0
        %958 = vmatpush1.bf16.msra.mxu0 %v950
        %959 = vmatprep.subr.bf16.mxu0 0
        %960 = vmatpush1.bf16.msra.mxu0 %v951
        %961 = vmatprep.subr.bf16.mxu0 0
        %962 = vmatpush1.bf16.msra.mxu0 0
        %963 = vmatprep.subr.bf16.mxu0 0
        %964 = vmatpush1.bf16.msra.mxu0 0
        %965 = vmatprep.subr.bf16.mxu0 0
        %966 = vmatpush1.bf16.msra.mxu0 0
        %967 = vmatprep.subr.bf16.mxu0 0
        %968 = vmatpush1.bf16.msra.mxu0 0
        %969 = vmatprep.subr.bf16.mxu0 0
        %970 = vmatpush1.bf16.msra.mxu0 0
        %971 = vmatprep.subr.bf16.mxu0 0
        %972 = vmatpush1.bf16.msra.mxu0 0
        %973 = vmatprep.subr.bf16.mxu0 0
        %974 = vmatpush1.bf16.msra.mxu0 0
        %975 = vmatprep.subr.bf16.mxu0 0
        %976 = vmatpush1.bf16.msra.mxu0 0
        %977 = vmatprep.subr.bf16.mxu0 0
        %978 = vmatpush1.bf16.msra.mxu0 0
        %979 = vmatprep.subr.bf16.mxu0 0
        %980 = vmatpush1.bf16.msra.mxu0 0
        %981 = vmatprep.subr.bf16.mxu0 0
        %982 = vmatpush1.bf16.msra.mxu0 0
        %983 = vmatprep.subr.bf16.mxu0 0
        %984 = vmatpush1.bf16.msra.mxu0 0
        %985 = vmatprep.subr.bf16.mxu0 0
        %986 = vmatpush1.bf16.msra.mxu0 0
        %987 = vmatprep.subr.bf16.mxu0 0
        %988 = vmatpush1.bf16.msra.mxu0 0
        %989 = vmatprep.mubr.bf16.mxu0 0
        %990 = vmatmul.mubr.bf16.gmra.mrb[0].mxu0 %v955
        %v991 = vpop.f32.mrb[0].mxu0
        %v992 = vadd.f32 %v940, %v991
        %v993 = vpop.f32.mrb[0].mxu0
        %v994 = vpop.f32.mrb[0].mxu0
        %v995 = vpop.f32.mrb[0].mxu0
        %996 = vdwg.mxu0
        %v997 = vld [vmem:[%s848] sm:$0xf]
        %v998 = vld [vmem:[%s848 + $0x4] sm:$0xf]
        %v999 = vld [vmem:[%s848 + $0x8] sm:$0xf]
        %v1000 = vld [vmem:[%s848 + $0xc] sm:$0xf]
        %v1001 = vld [vmem:[%s851] sm:$0x1]
        %v1003 = vlaneseq
        %v1004 = vshrl.u32 %v1003, 7
        %v1005 = vsub.s32 0, %v1004
        %v1006 = vrot.slane %v1001, %v1005
        %v1012 = vunpack.c.l.b16 %v997
        %v1013 = vunpack.c.l.b16 %v998
        %v1014 = vunpack.c.l.b16 %v999
        %v1015 = vunpack.c.l.b16 %v1000
        %v1016 = vpack.c.b16 %v1013, %v1012
        %v1017 = vpack.c.b16 %v1015, %v1014
        %1020 = vmatprep.subr.bf16.mxu0 0
        %1021 = vmatpush1.bf16.msra.mxu0 %v1016
        %1022 = vmatprep.subr.bf16.mxu0 0
        %1023 = vmatpush1.bf16.msra.mxu0 %v1017
        %1024 = vmatprep.subr.bf16.mxu0 0
        %1025 = vmatpush1.bf16.msra.mxu0 0
        %1026 = vmatprep.subr.bf16.mxu0 0
        %1027 = vmatpush1.bf16.msra.mxu0 0
        %1028 = vmatprep.subr.bf16.mxu0 0
        %1029 = vmatpush1.bf16.msra.mxu0 0
        %1030 = vmatprep.subr.bf16.mxu0 0
        %1031 = vmatpush1.bf16.msra.mxu0 0
        %1032 = vmatprep.subr.bf16.mxu0 0
        %1033 = vmatpush1.bf16.msra.mxu0 0
        %1034 = vmatprep.subr.bf16.mxu0 0
        %1035 = vmatpush1.bf16.msra.mxu0 0
        %1036 = vmatprep.subr.bf16.mxu0 0
        %1037 = vmatpush1.bf16.msra.mxu0 0
        %1038 = vmatprep.subr.bf16.mxu0 0
        %1039 = vmatpush1.bf16.msra.mxu0 0
        %1040 = vmatprep.subr.bf16.mxu0 0
        %1041 = vmatpush1.bf16.msra.mxu0 0
        %1042 = vmatprep.subr.bf16.mxu0 0
        %1043 = vmatpush1.bf16.msra.mxu0 0
        %1044 = vmatprep.subr.bf16.mxu0 0
        %1045 = vmatpush1.bf16.msra.mxu0 0
        %1046 = vmatprep.subr.bf16.mxu0 0
        %1047 = vmatpush1.bf16.msra.mxu0 0
        %1048 = vmatprep.subr.bf16.mxu0 0
        %1049 = vmatpush1.bf16.msra.mxu0 0
        %1050 = vmatprep.subr.bf16.mxu0 0
        %1051 = vmatpush1.bf16.msra.mxu0 0
        %1052 = vmatprep.mubr.bf16.mxu0 0
        %1053 = vmatmul.mubr.bf16.gmra.mrb[0].mxu0 %v955
        %v1054 = vpop.f32.mrb[0].mxu0
        %v1055 = vadd.f32 %v1006, %v1054
        %v1056 = vpop.f32.mrb[0].mxu0
        %v1057 = vpop.f32.mrb[0].mxu0
        %v1058 = vpop.f32.mrb[0].mxu0
        %1059 = vdwg.mxu0
        %v1060 = vld [vmem:[%s856] sm:$0xf]
        %v1061 = vld [vmem:[%s856 + $0x4] sm:$0xf]
        %v1062 = vld [vmem:[%s856 + $0x8] sm:$0xf]
        %v1063 = vld [vmem:[%s856 + $0xc] sm:$0xf]
        %v1064 = vld [vmem:[%s859] sm:$0x1]
        %v1066 = vlaneseq
        %v1067 = vshrl.u32 %v1066, 7
        %v1068 = vsub.s32 0, %v1067
        %v1069 = vrot.slane %v1064, %v1068
        %v1075 = vunpack.c.l.b16 %v1060
        %v1076 = vunpack.c.l.b16 %v1061
        %v1077 = vunpack.c.l.b16 %v1062
        %v1078 = vunpack.c.l.b16 %v1063
        %v1079 = vpack.c.b16 %v1076, %v1075
        %v1080 = vpack.c.b16 %v1078, %v1077
        %1083 = vmatprep.subr.bf16.mxu0 0
        %1084 = vmatpush1.bf16.msra.mxu0 %v1079
        %1085 = vmatprep.subr.bf16.mxu0 0
        %1086 = vmatpush1.bf16.msra.mxu0 %v1080
        %1087 = vmatprep.subr.bf16.mxu0 0
        %1088 = vmatpush1.bf16.msra.mxu0 0
        %1089 = vmatprep.subr.bf16.mxu0 0
        %1090 = vmatpush1.bf16.msra.mxu0 0
        %1091 = vmatprep.subr.bf16.mxu0 0
        %1092 = vmatpush1.bf16.msra.mxu0 0
        %1093 = vmatprep.subr.bf16.mxu0 0
        %1094 = vmatpush1.bf16.msra.mxu0 0
        %1095 = vmatprep.subr.bf16.mxu0 0
        %1096 = vmatpush1.bf16.msra.mxu0 0
        %1097 = vmatprep.subr.bf16.mxu0 0
        %1098 = vmatpush1.bf16.msra.mxu0 0
        %1099 = vmatprep.subr.bf16.mxu0 0
        %1100 = vmatpush1.bf16.msra.mxu0 0
        %1101 = vmatprep.subr.bf16.mxu0 0
        %1102 = vmatpush1.bf16.msra.mxu0 0
        %1103 = vmatprep.subr.bf16.mxu0 0
        %1104 = vmatpush1.bf16.msra.mxu0 0
        %1105 = vmatprep.subr.bf16.mxu0 0
        %1106 = vmatpush1.bf16.msra.mxu0 0
        %1107 = vmatprep.subr.bf16.mxu0 0
        %1108 = vmatpush1.bf16.msra.mxu0 0
        %1109 = vmatprep.subr.bf16.mxu0 0
        %1110 = vmatpush1.bf16.msra.mxu0 0
        %1111 = vmatprep.subr.bf16.mxu0 0
        %1112 = vmatpush1.bf16.msra.mxu0 0
        %1113 = vmatprep.subr.bf16.mxu0 0
        %1114 = vmatpush1.bf16.msra.mxu0 0
        %1115 = vmatprep.mubr.bf16.mxu0 0
        %1116 = vmatmul.mubr.bf16.gmra.mrb[0].mxu0 %v955
        %v1117 = vpop.f32.mrb[0].mxu0
        %v1118 = vadd.f32 %v1069, %v1117
        %v1119 = vpop.f32.mrb[0].mxu0
        %v1120 = vpop.f32.mrb[0].mxu0
        %v1121 = vpop.f32.mrb[0].mxu0
        %1122 = vdwg.mxu0
        %v1123 = vpack.c.bf16 %v992, %v992
        %v1124 = vpack.c.bf16 %v1055, %v1055
        %v1125 = vpack.c.bf16 %v1118, %v1118
        %vm1126 = vcmask 64512
        %v1128 = vsel %vm1126, %v1123, 0
        %v1131 = vsel %vm1126, %v1124, 0
        %1133 = vmatprep.subr.bf16.mxu0 0
        %1134 = vmatpush1.bf16.xpose.msra.mxu0 %v1131
        %1135 = vmatprep.subr.bf16.mxu0 0
        %1136 = vmatpush1.bf16.xpose.msra.mxu0 0
        %1137 = vmatprep.subr.bf16.mxu0 0
        %1138 = vmatpush1.bf16.xpose.msra.mxu0 0
        %1139 = vmatprep.subr.bf16.mxu0 0
        %1140 = vmatpush1.bf16.xpose.msra.mxu0 0
        %1141 = vmatprep.subr.bf16.mxu0 0
        %1142 = vmatpush1.bf16.xpose.msra.mxu0 0
        %1143 = vmatprep.subr.bf16.mxu0 0
        %1144 = vmatpush1.bf16.xpose.msra.mxu0 0
        %1145 = vmatprep.subr.bf16.mxu0 0
        %1146 = vmatpush1.bf16.xpose.msra.mxu0 0
        %1147 = vmatprep.subr.bf16.mxu0 0
        %1148 = vmatpush1.bf16.xpose.msra.mxu0 0
        %1149 = vmatprep.subr.bf16.mxu0 0
        %1150 = vmatpush1.bf16.xpose.msra.mxu0 0
        %1151 = vmatprep.subr.bf16.mxu0 0
        %1152 = vmatpush1.bf16.xpose.msra.mxu0 0
        %1153 = vmatprep.subr.bf16.mxu0 0
        %1154 = vmatpush1.bf16.xpose.msra.mxu0 0
        %1155 = vmatprep.subr.bf16.mxu0 0
        %1156 = vmatpush1.bf16.xpose.msra.mxu0 0
        %1157 = vmatprep.subr.bf16.mxu0 0
        %1158 = vmatpush1.bf16.xpose.msra.mxu0 0
        %1159 = vmatprep.subr.bf16.mxu0 0
        %1160 = vmatpush1.bf16.xpose.msra.mxu0 0
        %1161 = vmatprep.subr.bf16.mxu0 0
        %1162 = vmatpush1.bf16.xpose.msra.mxu0 0
        %1163 = vmatprep.subr.bf16.mxu0 0
        %1164 = vmatpush1.bf16.xpose.msra.mxu0 0
        %1165 = vmatprep.mubr.bf16.mxu0 0
        %1166 = vmatmul.mubr.bf16.gmra.mrb[0].mxu0 %v1128
        %v1167 = vpop.f32.mrb[0].mxu0
        %v1168 = vadd.f32 0.0, %v1167
        %v1169 = vpop.f32.mrb[0].mxu0
        %v1170 = vpop.f32.mrb[0].mxu0
        %v1171 = vpop.f32.mrb[0].mxu0
        %1172 = vdwg.mxu0
        %v1173 = vsel %vm1126, %v1168, -inf
        %1174 = vmax.xlane.f32.xlu0 %v1173
        %v1175 = vpop.xlane.xlu0 %1174
        %v1176 = vsub.f32 %v1168, %v1175
        %v1177 = vmul.f32 %v1176, 1.442695
        %v1178 = vpow.pop %v1177
        %v1179 = vsel %vm1126, %v1178, 0.0
        %1180 = vadd.xlane.f32.xlu0 %v1179
        %v1181 = vpop.xlane.xlu0 %1180
        %v1182 = vrcp.pop %v1181
        %v1183 = vmul.f32 %v1178, %v1182
        %v1184 = vpack.c.bf16 %v1183, %v1183
        %v1186 = vsel %vm1126, %v1184, 0
        %vm1188 = vcmask 1043456
        %v1190 = vsel %vm1188, %v1125, 0
        %1192 = vmatprep.subr.bf16.mxu0 0
        %1193 = vmatpush1.bf16.msra.mxu0 %v1190
        %1194 = vmatprep.subr.bf16.mxu0 0
        %1195 = vmatpush1.bf16.msra.mxu0 0
        %1196 = vmatprep.subr.bf16.mxu0 0
        %1197 = vmatpush1.bf16.msra.mxu0 0
        %1198 = vmatprep.subr.bf16.mxu0 0
        %1199 = vmatpush1.bf16.msra.mxu0 0
        %1200 = vmatprep.subr.bf16.mxu0 0
        %1201 = vmatpush1.bf16.msra.mxu0 0
        %1202 = vmatprep.subr.bf16.mxu0 0
        %1203 = vmatpush1.bf16.msra.mxu0 0
        %1204 = vmatprep.subr.bf16.mxu0 0
        %1205 = vmatpush1.bf16.msra.mxu0 0
        %1206 = vmatprep.subr.bf16.mxu0 0
        %1207 = vmatpush1.bf16.msra.mxu0 0
        %1208 = vmatprep.subr.bf16.mxu0 0
        %1209 = vmatpush1.bf16.msra.mxu0 0
        %1210 = vmatprep.subr.bf16.mxu0 0
        %1211 = vmatpush1.bf16.msra.mxu0 0
        %1212 = vmatprep.subr.bf16.mxu0 0
        %1213 = vmatpush1.bf16.msra.mxu0 0
        %1214 = vmatprep.subr.bf16.mxu0 0
        %1215 = vmatpush1.bf16.msra.mxu0 0
        %1216 = vmatprep.subr.bf16.mxu0 0
        %1217 = vmatpush1.bf16.msra.mxu0 0
        %1218 = vmatprep.subr.bf16.mxu0 0
        %1219 = vmatpush1.bf16.msra.mxu0 0
        %1220 = vmatprep.subr.bf16.mxu0 0
        %1221 = vmatpush1.bf16.msra.mxu0 0
        %1222 = vmatprep.subr.bf16.mxu0 0
        %1223 = vmatpush1.bf16.msra.mxu0 0
        %1224 = vmatprep.mubr.bf16.mxu0 0
        %1225 = vmatmul.mubr.bf16.gmra.mrb[0].mxu0 %v1186
        %v1226 = vpop.f32.mrb[0].mxu0
        %v1227 = vadd.f32 0.0, %v1226
        %v1228 = vpop.f32.mrb[0].mxu0
        %v1229 = vpop.f32.mrb[0].mxu0
        %v1230 = vpop.f32.mrb[0].mxu0
        %1231 = vdwg.mxu0
        %1233 = vrot.lane.b32.xlu0 %v1123, 120
        %v1234 = vpop.permute.xlu0 %1233
        %1236 = vrot.lane.b32.xlu0 %v1124, 120
        %v1237 = vpop.permute.xlu0 %1236
        %v1239 = vsel %vm1126, %v1234, 0
        %v1242 = vsel %vm1126, %v1237, 0
        %1244 = vmatprep.subr.bf16.mxu0 0
        %1245 = vmatpush1.bf16.xpose.msra.mxu0 %v1242
        %1246 = vmatprep.subr.bf16.mxu0 0
        %1247 = vmatpush1.bf16.xpose.msra.mxu0 0
        %1248 = vmatprep.subr.bf16.mxu0 0
        %1249 = vmatpush1.bf16.xpose.msra.mxu0 0
        %1250 = vmatprep.subr.bf16.mxu0 0
        %1251 = vmatpush1.bf16.xpose.msra.mxu0 0
        %1252 = vmatprep.subr.bf16.mxu0 0
        %1253 = vmatpush1.bf16.xpose.msra.mxu0 0
        %1254 = vmatprep.subr.bf16.mxu0 0
        %1255 = vmatpush1.bf16.xpose.msra.mxu0 0
        %1256 = vmatprep.subr.bf16.mxu0 0
        %1257 = vmatpush1.bf16.xpose.msra.mxu0 0
        %1258 = vmatprep.subr.bf16.mxu0 0
        %1259 = vmatpush1.bf16.xpose.msra.mxu0 0
        %1260 = vmatprep.subr.bf16.mxu0 0
        %1261 = vmatpush1.bf16.xpose.msra.mxu0 0
        %1262 = vmatprep.subr.bf16.mxu0 0
        %1263 = vmatpush1.bf16.xpose.msra.mxu0 0
        %1264 = vmatprep.subr.bf16.mxu0 0
        %1265 = vmatpush1.bf16.xpose.msra.mxu0 0
        %1266 = vmatprep.subr.bf16.mxu0 0
        %1267 = vmatpush1.bf16.xpose.msra.mxu0 0
        %1268 = vmatprep.subr.bf16.mxu0 0
        %1269 = vmatpush1.bf16.xpose.msra.mxu0 0
        %1270 = vmatprep.subr.bf16.mxu0 0
        %1271 = vmatpush1.bf16.xpose.msra.mxu0 0
        %1272 = vmatprep.subr.bf16.mxu0 0
        %1273 = vmatpush1.bf16.xpose.msra.mxu0 0
        %1274 = vmatprep.subr.bf16.mxu0 0
        %1275 = vmatpush1.bf16.xpose.msra.mxu0 0
        %1276 = vmatprep.mubr.bf16.mxu0 0
        %1277 = vmatmul.mubr.bf16.gmra.mrb[0].mxu0 %v1239
        %v1278 = vpop.f32.mrb[0].mxu0
        %v1279 = vadd.f32 0.0, %v1278
        %v1280 = vpop.f32.mrb[0].mxu0
        %v1281 = vpop.f32.mrb[0].mxu0
        %v1282 = vpop.f32.mrb[0].mxu0
        %1283 = vdwg.mxu0
        %v1284 = vsel %vm1126, %v1279, -inf
        %1285 = vmax.xlane.f32.xlu0 %v1284
        %v1286 = vpop.xlane.xlu0 %1285
        %v1287 = vsub.f32 %v1279, %v1286
        %v1288 = vmul.f32 %v1287, 1.442695
        %v1289 = vpow.pop %v1288
        %v1290 = vsel %vm1126, %v1289, 0.0
        %1291 = vadd.xlane.f32.xlu0 %v1290
        %v1292 = vpop.xlane.xlu0 %1291
        %v1293 = vrcp.pop %v1292
        %v1294 = vmul.f32 %v1289, %v1293
        %v1295 = vpack.c.bf16 %v1294, %v1294
        %1297 = vrot.lane.b32.xlu0 %v1125, 120
        %v1298 = vpop.permute.xlu0 %1297
        %v1300 = vsel %vm1126, %v1295, 0
        %v1303 = vsel %vm1188, %v1298, 0
        %1305 = vmatprep.subr.bf16.mxu0 0
        %1306 = vmatpush1.bf16.msra.mxu0 %v1303
        %1307 = vmatprep.subr.bf16.mxu0 0
        %1308 = vmatpush1.bf16.msra.mxu0 0
        %1309 = vmatprep.subr.bf16.mxu0 0
        %1310 = vmatpush1.bf16.msra.mxu0 0
        %1311 = vmatprep.subr.bf16.mxu0 0
        %1312 = vmatpush1.bf16.msra.mxu0 0
        %1313 = vmatprep.subr.bf16.mxu0 0
        %1314 = vmatpush1.bf16.msra.mxu0 0
        %1315 = vmatprep.subr.bf16.mxu0 0
        %1316 = vmatpush1.bf16.msra.mxu0 0
        %1317 = vmatprep.subr.bf16.mxu0 0
        %1318 = vmatpush1.bf16.msra.mxu0 0
        %1319 = vmatprep.subr.bf16.mxu0 0
        %1320 = vmatpush1.bf16.msra.mxu0 0
        %1321 = vmatprep.subr.bf16.mxu0 0
        %1322 = vmatpush1.bf16.msra.mxu0 0
        %1323 = vmatprep.subr.bf16.mxu0 0
        %1324 = vmatpush1.bf16.msra.mxu0 0
        %1325 = vmatprep.subr.bf16.mxu0 0
        %1326 = vmatpush1.bf16.msra.mxu0 0
        %1327 = vmatprep.subr.bf16.mxu0 0
        %1328 = vmatpush1.bf16.msra.mxu0 0
        %1329 = vmatprep.subr.bf16.mxu0 0
        %1330 = vmatpush1.bf16.msra.mxu0 0
        %1331 = vmatprep.subr.bf16.mxu0 0
        %1332 = vmatpush1.bf16.msra.mxu0 0
        %1333 = vmatprep.subr.bf16.mxu0 0
        %1334 = vmatpush1.bf16.msra.mxu0 0
        %1335 = vmatprep.subr.bf16.mxu0 0
        %1336 = vmatpush1.bf16.msra.mxu0 0
        %1337 = vmatprep.mubr.bf16.mxu0 0
        %1338 = vmatmul.mubr.bf16.gmra.mrb[0].mxu0 %v1300
        %v1339 = vpop.f32.mrb[0].mxu0
        %v1340 = vadd.f32 0.0, %v1339
        %v1341 = vpop.f32.mrb[0].mxu0
        %v1342 = vpop.f32.mrb[0].mxu0
        %v1343 = vpop.f32.mrb[0].mxu0
        %1344 = vdwg.mxu0
        %1345 = vrot.lane.b32.xlu0 %v1123, 112
        %v1346 = vpop.permute.xlu0 %1345
        %1347 = vrot.lane.b32.xlu0 %v1124, 112
        %v1348 = vpop.permute.xlu0 %1347
        %v1350 = vsel %vm1126, %v1346, 0
        %v1353 = vsel %vm1126, %v1348, 0
        %1355 = vmatprep.subr.bf16.mxu0 0
        %1356 = vmatpush1.bf16.xpose.msra.mxu0 %v1353
        %1357 = vmatprep.subr.bf16.mxu0 0
        %1358 = vmatpush1.bf16.xpose.msra.mxu0 0
        %1359 = vmatprep.subr.bf16.mxu0 0
        %1360 = vmatpush1.bf16.xpose.msra.mxu0 0
        %1361 = vmatprep.subr.bf16.mxu0 0
        %1362 = vmatpush1.bf16.xpose.msra.mxu0 0
        %1363 = vmatprep.subr.bf16.mxu0 0
        %1364 = vmatpush1.bf16.xpose.msra.mxu0 0
        %1365 = vmatprep.subr.bf16.mxu0 0
        %1366 = vmatpush1.bf16.xpose.msra.mxu0 0
        %1367 = vmatprep.subr.bf16.mxu0 0
        %1368 = vmatpush1.bf16.xpose.msra.mxu0 0
        %1369 = vmatprep.subr.bf16.mxu0 0
        %1370 = vmatpush1.bf16.xpose.msra.mxu0 0
        %1371 = vmatprep.subr.bf16.mxu0 0
        %1372 = vmatpush1.bf16.xpose.msra.mxu0 0
        %1373 = vmatprep.subr.bf16.mxu0 0
        %1374 = vmatpush1.bf16.xpose.msra.mxu0 0
        %1375 = vmatprep.subr.bf16.mxu0 0
        %1376 = vmatpush1.bf16.xpose.msra.mxu0 0
        %1377 = vmatprep.subr.bf16.mxu0 0
        %1378 = vmatpush1.bf16.xpose.msra.mxu0 0
        %1379 = vmatprep.subr.bf16.mxu0 0
        %1380 = vmatpush1.bf16.xpose.msra.mxu0 0
        %1381 = vmatprep.subr.bf16.mxu0 0
        %1382 = vmatpush1.bf16.xpose.msra.mxu0 0
        %1383 = vmatprep.subr.bf16.mxu0 0
        %1384 = vmatpush1.bf16.xpose.msra.mxu0 0
        %1385 = vmatprep.subr.bf16.mxu0 0
        %1386 = vmatpush1.bf16.xpose.msra.mxu0 0
        %1387 = vmatprep.mubr.bf16.mxu0 0
        %1388 = vmatmul.mubr.bf16.gmra.mrb[0].mxu0 %v1350
        %v1389 = vpop.f32.mrb[0].mxu0
        %v1390 = vadd.f32 0.0, %v1389
        %v1391 = vpop.f32.mrb[0].mxu0
        %v1392 = vpop.f32.mrb[0].mxu0
        %v1393 = vpop.f32.mrb[0].mxu0
        %1394 = vdwg.mxu0
        %v1395 = vsel %vm1126, %v1390, -inf
        %1396 = vmax.xlane.f32.xlu0 %v1395
        %v1397 = vpop.xlane.xlu0 %1396
        %v1398 = vsub.f32 %v1390, %v1397
        %v1399 = vmul.f32 %v1398, 1.442695
        %v1400 = vpow.pop %v1399
        %v1401 = vsel %vm1126, %v1400, 0.0
        %1402 = vadd.xlane.f32.xlu0 %v1401
        %v1403 = vpop.xlane.xlu0 %1402
        %v1404 = vrcp.pop %v1403
        %v1405 = vmul.f32 %v1400, %v1404
        %v1406 = vpack.c.bf16 %v1405, %v1405
        %1407 = vrot.lane.b32.xlu0 %v1125, 112
        %v1408 = vpop.permute.xlu0 %1407
        %v1410 = vsel %vm1126, %v1406, 0
        %v1413 = vsel %vm1188, %v1408, 0
        %1415 = vmatprep.subr.bf16.mxu0 0
        %1416 = vmatpush1.bf16.msra.mxu0 %v1413
        %1417 = vmatprep.subr.bf16.mxu0 0
        %1418 = vmatpush1.bf16.msra.mxu0 0
        %1419 = vmatprep.subr.bf16.mxu0 0
        %1420 = vmatpush1.bf16.msra.mxu0 0
        %1421 = vmatprep.subr.bf16.mxu0 0
        %1422 = vmatpush1.bf16.msra.mxu0 0
        %1423 = vmatprep.subr.bf16.mxu0 0
        %1424 = vmatpush1.bf16.msra.mxu0 0
        %1425 = vmatprep.subr.bf16.mxu0 0
        %1426 = vmatpush1.bf16.msra.mxu0 0
        %1427 = vmatprep.subr.bf16.mxu0 0
        %1428 = vmatpush1.bf16.msra.mxu0 0
        %1429 = vmatprep.subr.bf16.mxu0 0
        %1430 = vmatpush1.bf16.msra.mxu0 0
        %1431 = vmatprep.subr.bf16.mxu0 0
        %1432 = vmatpush1.bf16.msra.mxu0 0
        %1433 = vmatprep.subr.bf16.mxu0 0
        %1434 = vmatpush1.bf16.msra.mxu0 0
        %1435 = vmatprep.subr.bf16.mxu0 0
        %1436 = vmatpush1.bf16.msra.mxu0 0
        %1437 = vmatprep.subr.bf16.mxu0 0
        %1438 = vmatpush1.bf16.msra.mxu0 0
        %1439 = vmatprep.subr.bf16.mxu0 0
        %1440 = vmatpush1.bf16.msra.mxu0 0
        %1441 = vmatprep.subr.bf16.mxu0 0
        %1442 = vmatpush1.bf16.msra.mxu0 0
        %1443 = vmatprep.subr.bf16.mxu0 0
        %1444 = vmatpush1.bf16.msra.mxu0 0
        %1445 = vmatprep.subr.bf16.mxu0 0
        %1446 = vmatpush1.bf16.msra.mxu0 0
        %1447 = vmatprep.mubr.bf16.mxu0 0
        %1448 = vmatmul.mubr.bf16.gmra.mrb[0].mxu0 %v1410
        %v1449 = vpop.f32.mrb[0].mxu0
        %v1450 = vadd.f32 0.0, %v1449
        %v1451 = vpop.f32.mrb[0].mxu0
        %v1452 = vpop.f32.mrb[0].mxu0
        %v1453 = vpop.f32.mrb[0].mxu0
        %1454 = vdwg.mxu0
        %1455 = vrot.lane.b32.xlu0 %v1123, 104
        %v1456 = vpop.permute.xlu0 %1455
        %1457 = vrot.lane.b32.xlu0 %v1124, 104
        %v1458 = vpop.permute.xlu0 %1457
        %v1460 = vsel %vm1126, %v1456, 0
        %v1463 = vsel %vm1126, %v1458, 0
        %1465 = vmatprep.subr.bf16.mxu0 0
        %1466 = vmatpush1.bf16.xpose.msra.mxu0 %v1463
        %1467 = vmatprep.subr.bf16.mxu0 0
        %1468 = vmatpush1.bf16.xpose.msra.mxu0 0
        %1469 = vmatprep.subr.bf16.mxu0 0
        %1470 = vmatpush1.bf16.xpose.msra.mxu0 0
        %1471 = vmatprep.subr.bf16.mxu0 0
        %1472 = vmatpush1.bf16.xpose.msra.mxu0 0
        %1473 = vmatprep.subr.bf16.mxu0 0
        %1474 = vmatpush1.bf16.xpose.msra.mxu0 0
        %1475 = vmatprep.subr.bf16.mxu0 0
        %1476 = vmatpush1.bf16.xpose.msra.mxu0 0
        %1477 = vmatprep.subr.bf16.mxu0 0
        %1478 = vmatpush1.bf16.xpose.msra.mxu0 0
        %1479 = vmatprep.subr.bf16.mxu0 0
        %1480 = vmatpush1.bf16.xpose.msra.mxu0 0
        %1481 = vmatprep.subr.bf16.mxu0 0
        %1482 = vmatpush1.bf16.xpose.msra.mxu0 0
        %1483 = vmatprep.subr.bf16.mxu0 0
        %1484 = vmatpush1.bf16.xpose.msra.mxu0 0
        %1485 = vmatprep.subr.bf16.mxu0 0
        %1486 = vmatpush1.bf16.xpose.msra.mxu0 0
        %1487 = vmatprep.subr.bf16.mxu0 0
        %1488 = vmatpush1.bf16.xpose.msra.mxu0 0
        %1489 = vmatprep.subr.bf16.mxu0 0
        %1490 = vmatpush1.bf16.xpose.msra.mxu0 0
        %1491 = vmatprep.subr.bf16.mxu0 0
        %1492 = vmatpush1.bf16.xpose.msra.mxu0 0
        %1493 = vmatprep.subr.bf16.mxu0 0
        %1494 = vmatpush1.bf16.xpose.msra.mxu0 0
        %1495 = vmatprep.subr.bf16.mxu0 0
        %1496 = vmatpush1.bf16.xpose.msra.mxu0 0
        %1497 = vmatprep.mubr.bf16.mxu0 0
        %1498 = vmatmul.mubr.bf16.gmra.mrb[0].mxu0 %v1460
        %v1499 = vpop.f32.mrb[0].mxu0
        %v1500 = vadd.f32 0.0, %v1499
        %v1501 = vpop.f32.mrb[0].mxu0
        %v1502 = vpop.f32.mrb[0].mxu0
        %v1503 = vpop.f32.mrb[0].mxu0
        %1504 = vdwg.mxu0
        %v1505 = vsel %vm1126, %v1500, -inf
        %1506 = vmax.xlane.f32.xlu0 %v1505
        %v1507 = vpop.xlane.xlu0 %1506
        %v1508 = vsub.f32 %v1500, %v1507
        %v1509 = vmul.f32 %v1508, 1.442695
        %v1510 = vpow.pop %v1509
        %v1511 = vsel %vm1126, %v1510, 0.0
        %1512 = vadd.xlane.f32.xlu0 %v1511
        %v1513 = vpop.xlane.xlu0 %1512
        %v1514 = vrcp.pop %v1513
        %v1515 = vmul.f32 %v1510, %v1514
        %v1516 = vpack.c.bf16 %v1515, %v1515
        %1517 = vrot.lane.b32.xlu0 %v1125, 104
        %v1518 = vpop.permute.xlu0 %1517
        %v1520 = vsel %vm1126, %v1516, 0
        %v1523 = vsel %vm1188, %v1518, 0
        %1525 = vmatprep.subr.bf16.mxu0 0
        %1526 = vmatpush1.bf16.msra.mxu0 %v1523
        %1527 = vmatprep.subr.bf16.mxu0 0
        %1528 = vmatpush1.bf16.msra.mxu0 0
        %1529 = vmatprep.subr.bf16.mxu0 0
        %1530 = vmatpush1.bf16.msra.mxu0 0
        %1531 = vmatprep.subr.bf16.mxu0 0
        %1532 = vmatpush1.bf16.msra.mxu0 0
        %1533 = vmatprep.subr.bf16.mxu0 0
        %1534 = vmatpush1.bf16.msra.mxu0 0
        %1535 = vmatprep.subr.bf16.mxu0 0
        %1536 = vmatpush1.bf16.msra.mxu0 0
        %1537 = vmatprep.subr.bf16.mxu0 0
        %1538 = vmatpush1.bf16.msra.mxu0 0
        %1539 = vmatprep.subr.bf16.mxu0 0
        %1540 = vmatpush1.bf16.msra.mxu0 0
        %1541 = vmatprep.subr.bf16.mxu0 0
        %1542 = vmatpush1.bf16.msra.mxu0 0
        %1543 = vmatprep.subr.bf16.mxu0 0
        %1544 = vmatpush1.bf16.msra.mxu0 0
        %1545 = vmatprep.subr.bf16.mxu0 0
        %1546 = vmatpush1.bf16.msra.mxu0 0
        %1547 = vmatprep.subr.bf16.mxu0 0
        %1548 = vmatpush1.bf16.msra.mxu0 0
        %1549 = vmatprep.subr.bf16.mxu0 0
        %1550 = vmatpush1.bf16.msra.mxu0 0
        %1551 = vmatprep.subr.bf16.mxu0 0
        %1552 = vmatpush1.bf16.msra.mxu0 0
        %1553 = vmatprep.subr.bf16.mxu0 0
        %1554 = vmatpush1.bf16.msra.mxu0 0
        %1555 = vmatprep.subr.bf16.mxu0 0
        %1556 = vmatpush1.bf16.msra.mxu0 0
        %1557 = vmatprep.mubr.bf16.mxu0 0
        %1558 = vmatmul.mubr.bf16.gmra.mrb[0].mxu0 %v1520
        %v1559 = vpop.f32.mrb[0].mxu0
        %v1560 = vadd.f32 0.0, %v1559
        %v1561 = vpop.f32.mrb[0].mxu0
        %v1562 = vpop.f32.mrb[0].mxu0
        %v1563 = vpop.f32.mrb[0].mxu0
        %1564 = vdwg.mxu0
        %1566 = vrot.lane.b32.xlu0 %v1340, 8
        %v1567 = vpop.permute.xlu0 %1566
        %1570 = vrot.lane.b32.xlu0 %v1450, 16
        %v1571 = vpop.permute.xlu0 %1570
        %1574 = vrot.lane.b32.xlu0 %v1560, 24
        %v1575 = vpop.permute.xlu0 %1574
        %v1577 = vsel %vm1126, %v1227, %v1567
        %vm1578 = vcmask 130048
        %v1579 = vsel %vm1578, %v1577, %v1571
        %vm1580 = vcmask 195584
        %v1581 = vsel %vm1580, %v1579, %v1575
        %v1582 = vpack.c.bf16 %v1581, %v1581
        %v1583 = vld [vmem:[%s864] sm:$0xf]
        %v1584 = vld [vmem:[%s864 + $0x4] sm:$0xf]
        %v1585 = vld [vmem:[%s864 + $0x8] sm:$0xf]
        %v1586 = vld [vmem:[%s864 + $0xc] sm:$0xf]
        %v1587 = vld [vmem:[%s867] sm:$0x1]
        %v1589 = vlaneseq
        %v1590 = vshrl.u32 %v1589, 7
        %v1591 = vsub.s32 0, %v1590
        %v1592 = vrot.slane %v1587, %v1591
        %v1598 = vunpack.c.l.b16 %v1583
        %v1599 = vunpack.c.l.b16 %v1584
        %v1600 = vunpack.c.l.b16 %v1585
        %v1601 = vunpack.c.l.b16 %v1586
        %v1602 = vpack.c.b16 %v1599, %v1598
        %v1603 = vpack.c.b16 %v1601, %v1600
        %v1607 = vsel %vm901, %v1582, 0
        %1609 = vmatprep.subr.bf16.mxu0 0
        %1610 = vmatpush1.bf16.msra.mxu0 %v1602
        %1611 = vmatprep.subr.bf16.mxu0 0
        %1612 = vmatpush1.bf16.msra.mxu0 %v1603
        %1613 = vmatprep.subr.bf16.mxu0 0
        %1614 = vmatpush1.bf16.msra.mxu0 0
        %1615 = vmatprep.subr.bf16.mxu0 0
        %1616 = vmatpush1.bf16.msra.mxu0 0
        %1617 = vmatprep.subr.bf16.mxu0 0
        %1618 = vmatpush1.bf16.msra.mxu0 0
        %1619 = vmatprep.subr.bf16.mxu0 0
        %1620 = vmatpush1.bf16.msra.mxu0 0
        %1621 = vmatprep.subr.bf16.mxu0 0
        %1622 = vmatpush1.bf16.msra.mxu0 0
        %1623 = vmatprep.subr.bf16.mxu0 0
        %1624 = vmatpush1.bf16.msra.mxu0 0
        %1625 = vmatprep.subr.bf16.mxu0 0
        %1626 = vmatpush1.bf16.msra.mxu0 0
        %1627 = vmatprep.subr.bf16.mxu0 0
        %1628 = vmatpush1.bf16.msra.mxu0 0
        %1629 = vmatprep.subr.bf16.mxu0 0
        %1630 = vmatpush1.bf16.msra.mxu0 0
        %1631 = vmatprep.subr.bf16.mxu0 0
        %1632 = vmatpush1.bf16.msra.mxu0 0
        %1633 = vmatprep.subr.bf16.mxu0 0
        %1634 = vmatpush1.bf16.msra.mxu0 0
        %1635 = vmatprep.subr.bf16.mxu0 0
        %1636 = vmatpush1.bf16.msra.mxu0 0
        %1637 = vmatprep.subr.bf16.mxu0 0
        %1638 = vmatpush1.bf16.msra.mxu0 0
        %1639 = vmatprep.subr.bf16.mxu0 0
        %1640 = vmatpush1.bf16.msra.mxu0 0
        %1641 = vmatprep.mubr.bf16.mxu0 0
        %1642 = vmatmul.mubr.bf16.gmra.mrb[0].mxu0 %v1607
        %v1643 = vpop.f32.mrb[0].mxu0
        %v1644 = vadd.f32 %v1592, %v1643
        %v1645 = vpop.f32.mrb[0].mxu0
        %v1646 = vpop.f32.mrb[0].mxu0
        %v1647 = vpop.f32.mrb[0].mxu0
        %1648 = vdwg.mxu0
        %v1649 = vadd.f32 %v898, %v1644
        %v1650 = vld [vmem:[%s870] sm:$0x1]
        %v1651 = vld [vmem:[%s873] sm:$0x1]
        %v1652 = vsel %vm901, %v1649, 0.0
        %1653 = vadd.xlane.f32.xlu0 %v1652
        %v1654 = vpop.xlane.xlu0 %1653
        %v1655 = vmul.f32 %v1654, %v905
        %v1656 = vsub.f32 %v1649, %v1655
        %v1657 = vmul.f32 %v1656, %v1656
        %v1658 = vsel %vm901, %v1657, 0.0
        %1659 = vadd.xlane.f32.xlu0 %v1658
        %v1660 = vpop.xlane.xlu0 %1659
        %v1661 = vmul.f32 %v1660, %v905
        %v1662 = vadd.f32 %v1661, 1e-05
        %v1663 = vrsqrt.pop %v1662
        %v1664 = vmul.f32 %v1656, %v1663
        %v1666 = vlaneseq
        %v1667 = vshrl.u32 %v1666, 7
        %v1668 = vsub.s32 0, %v1667
        %v1669 = vrot.slane %v1650, %v1668
        %v1671 = vmul.f32 %v1664, %v1669
        %v1673 = vlaneseq
        %v1674 = vshrl.u32 %v1673, 7
        %v1675 = vsub.s32 0, %v1674
        %v1676 = vrot.slane %v1651, %v1675
        %v1678 = vadd.f32 %v1671, %v1676
        %v1679 = vpack.c.bf16 %v1678, %v1678
        %v1680 = vld [vmem:[%s878] sm:$0xf]
        %v1681 = vld [vmem:[%s878 + $0x4] sm:$0xf]
        %v1682 = vld [vmem:[%s878 + $0x8] sm:$0xf]
        %v1683 = vld [vmem:[%s878 + $0xc] sm:$0xf]
        %v1684 = vld [vmem:[%s881] sm:$0x1]
        %v1686 = vlaneseq
        %v1687 = vshrl.u32 %v1686, 7
        %v1688 = vsub.s32 0, %v1687
        %v1689 = vrot.slane %v1684, %v1688
        %v1695 = vunpack.c.l.b16 %v1680
        %v1696 = vunpack.c.l.b16 %v1681
        %v1697 = vunpack.c.l.b16 %v1682
        %v1698 = vunpack.c.l.b16 %v1683
        %v1699 = vpack.c.b16 %v1696, %v1695
        %v1700 = vpack.c.b16 %v1698, %v1697
        %v1704 = vsel %vm901, %v1679, 0
        %1706 = vmatprep.subr.bf16.mxu0 0
        %1707 = vmatpush1.bf16.msra.mxu0 %v1699
        %1708 = vmatprep.subr.bf16.mxu0 0
        %1709 = vmatpush1.bf16.msra.mxu0 %v1700
        %1710 = vmatprep.subr.bf16.mxu0 0
        %1711 = vmatpush1.bf16.msra.mxu0 0
        %1712 = vmatprep.subr.bf16.mxu0 0
        %1713 = vmatpush1.bf16.msra.mxu0 0
        %1714 = vmatprep.subr.bf16.mxu0 0
        %1715 = vmatpush1.bf16.msra.mxu0 0
        %1716 = vmatprep.subr.bf16.mxu0 0
        %1717 = vmatpush1.bf16.msra.mxu0 0
        %1718 = vmatprep.subr.bf16.mxu0 0
        %1719 = vmatpush1.bf16.msra.mxu0 0
        %1720 = vmatprep.subr.bf16.mxu0 0
        %1721 = vmatpush1.bf16.msra.mxu0 0
        %1722 = vmatprep.subr.bf16.mxu0 0
        %1723 = vmatpush1.bf16.msra.mxu0 0
        %1724 = vmatprep.subr.bf16.mxu0 0
        %1725 = vmatpush1.bf16.msra.mxu0 0
        %1726 = vmatprep.subr.bf16.mxu0 0
        %1727 = vmatpush1.bf16.msra.mxu0 0
        %1728 = vmatprep.subr.bf16.mxu0 0
        %1729 = vmatpush1.bf16.msra.mxu0 0
        %1730 = vmatprep.subr.bf16.mxu0 0
        %1731 = vmatpush1.bf16.msra.mxu0 0
        %1732 = vmatprep.subr.bf16.mxu0 0
        %1733 = vmatpush1.bf16.msra.mxu0 0
        %1734 = vmatprep.subr.bf16.mxu0 0
        %1735 = vmatpush1.bf16.msra.mxu0 0
        %1736 = vmatprep.subr.bf16.mxu0 0
        %1737 = vmatpush1.bf16.msra.mxu0 0
        %1738 = vmatprep.mubr.bf16.mxu0 0
        %1739 = vmatmul.mubr.bf16.gmra.mrb[0].mxu0 %v1704
        %v1740 = vpop.f32.mrb[0].mxu0
        %v1741 = vadd.f32 %v1689, %v1740
        %v1742 = vpop.f32.mrb[0].mxu0
        %v1743 = vpop.f32.mrb[0].mxu0
        %v1744 = vpop.f32.mrb[0].mxu0
        %1745 = vdwg.mxu0
        %v1746 = vmul.f32 %v1741, 0.5
        %v1747 = vmul.f32 %v1741, 0.70710677
        %v1748 = verf.f32.pop %v1747
        %v1749 = vadd.f32 %v1748, 1.0
        %v1750 = vmul.f32 %v1746, %v1749
        %v1751 = vpack.c.bf16 %v1750, %v1750
        %v1752 = vld [vmem:[%s886] sm:$0xf]
        %v1753 = vld [vmem:[%s886 + $0x4] sm:$0xf]
        %v1754 = vld [vmem:[%s886 + $0x8] sm:$0xf]
        %v1755 = vld [vmem:[%s886 + $0xc] sm:$0xf]
        %v1756 = vld [vmem:[%s886 + $0x10] sm:$0xf]
        %v1757 = vld [vmem:[%s886 + $0x14] sm:$0xf]
        %v1758 = vld [vmem:[%s886 + $0x18] sm:$0xf]
        %v1759 = vld [vmem:[%s886 + $0x1c] sm:$0xf]
        %v1760 = vld [vmem:[%s886 + $0x20] sm:$0xf]
        %v1761 = vld [vmem:[%s886 + $0x24] sm:$0xf]
        %v1762 = vld [vmem:[%s886 + $0x28] sm:$0xf]
        %v1763 = vld [vmem:[%s886 + $0x2c] sm:$0xf]
        %v1764 = vld [vmem:[%s886 + $0x30] sm:$0xf]
        %v1765 = vld [vmem:[%s886 + $0x34] sm:$0xf]
        %v1766 = vld [vmem:[%s886 + $0x38] sm:$0xf]
        %v1767 = vld [vmem:[%s886 + $0x3c] sm:$0xf]
        %v1768 = vld [vmem:[%s889] sm:$0x1]
        %v1770 = vlaneseq
        %v1771 = vshrl.u32 %v1770, 7
        %v1772 = vsub.s32 0, %v1771
        %v1773 = vrot.slane %v1768, %v1772
        %v1791 = vunpack.c.l.b16 %v1752
        %v1792 = vunpack.c.l.b16 %v1753
        %v1793 = vunpack.c.l.b16 %v1754
        %v1794 = vunpack.c.l.b16 %v1755
        %v1795 = vunpack.c.l.b16 %v1756
        %v1796 = vunpack.c.l.b16 %v1757
        %v1797 = vunpack.c.l.b16 %v1758
        %v1798 = vunpack.c.l.b16 %v1759
        %v1799 = vunpack.c.l.b16 %v1760
        %v1800 = vunpack.c.l.b16 %v1761
        %v1801 = vunpack.c.l.b16 %v1762
        %v1802 = vunpack.c.l.b16 %v1763
        %v1803 = vunpack.c.l.b16 %v1764
        %v1804 = vunpack.c.l.b16 %v1765
        %v1805 = vunpack.c.l.b16 %v1766
        %v1806 = vunpack.c.l.b16 %v1767
        %v1807 = vpack.c.b16 %v1792, %v1791
        %v1808 = vpack.c.b16 %v1794, %v1793
        %v1809 = vpack.c.b16 %v1796, %v1795
        %v1810 = vpack.c.b16 %v1798, %v1797
        %v1811 = vpack.c.b16 %v1800, %v1799
        %v1812 = vpack.c.b16 %v1802, %v1801
        %v1813 = vpack.c.b16 %v1804, %v1803
        %v1814 = vpack.c.b16 %v1806, %v1805
        %1823 = vmatprep.subr.bf16.mxu0 0
        %1824 = vmatpush1.bf16.msra.mxu0 %v1807
        %1825 = vmatprep.subr.bf16.mxu0 0
        %1826 = vmatpush1.bf16.msra.mxu0 %v1808
        %1827 = vmatprep.subr.bf16.mxu0 0
        %1828 = vmatpush1.bf16.msra.mxu0 %v1809
        %1829 = vmatprep.subr.bf16.mxu0 0
        %1830 = vmatpush1.bf16.msra.mxu0 %v1810
        %1831 = vmatprep.subr.bf16.mxu0 0
        %1832 = vmatpush1.bf16.msra.mxu0 %v1811
        %1833 = vmatprep.subr.bf16.mxu0 0
        %1834 = vmatpush1.bf16.msra.mxu0 %v1812
        %1835 = vmatprep.subr.bf16.mxu0 0
        %1836 = vmatpush1.bf16.msra.mxu0 %v1813
        %1837 = vmatprep.subr.bf16.mxu0 0
        %1838 = vmatpush1.bf16.msra.mxu0 %v1814
        %1839 = vmatprep.subr.bf16.mxu0 0
        %1840 = vmatpush1.bf16.msra.mxu0 0
        %1841 = vmatprep.subr.bf16.mxu0 0
        %1842 = vmatpush1.bf16.msra.mxu0 0
        %1843 = vmatprep.subr.bf16.mxu0 0
        %1844 = vmatpush1.bf16.msra.mxu0 0
        %1845 = vmatprep.subr.bf16.mxu0 0
        %1846 = vmatpush1.bf16.msra.mxu0 0
        %1847 = vmatprep.subr.bf16.mxu0 0
        %1848 = vmatpush1.bf16.msra.mxu0 0
        %1849 = vmatprep.subr.bf16.mxu0 0
        %1850 = vmatpush1.bf16.msra.mxu0 0
        %1851 = vmatprep.subr.bf16.mxu0 0
        %1852 = vmatpush1.bf16.msra.mxu0 0
        %1853 = vmatprep.subr.bf16.mxu0 0
        %1854 = vmatpush1.bf16.msra.mxu0 0
        %1855 = vmatprep.mubr.bf16.mxu0 0
        %1856 = vmatmul.mubr.bf16.gmra.mrb[0].mxu0 %v1751
        %v1857 = vpop.f32.mrb[0].mxu0
        %v1858 = vadd.f32 %v1773, %v1857
        %v1859 = vpop.f32.mrb[0].mxu0
        %v1860 = vpop.f32.mrb[0].mxu0
        %v1861 = vpop.f32.mrb[0].mxu0
        %1862 = vdwg.mxu0
        %v1863 = vadd.f32 %v1649, %v1858
        %1864 = vst.msk [vmem:[#allocation2] sm:$0xff] %vm901, %v1863
        %p1865 = scmp.eq.s32.totalorder %s41, 1
        // Predicated region
        $region105: #{tpu_custom_call.1} parent=95 // pred_check
          %p1866 = pneg %p1865
        $region106: #{tpu_custom_call.1} parent=95 // pred_check_branch
          %1868 = sbr.rel (%p1866) target = $region108
        $region107: #{tpu_custom_call.1} parent=95 // pred_region
          %v1869 = vld [vmem:[%s17] sm:$0x1]
          %v1870 = vld [vmem:[%s18] sm:$0x1]
          %v1871 = vsel %vm901, %v1863, 0.0
          %1872 = vadd.xlane.f32.xlu0 %v1871
          %v1873 = vpop.xlane.xlu0 %1872
          %v1874 = vmul.f32 %v1873, %v905
          %v1875 = vsub.f32 %v1863, %v1874
          %v1876 = vmul.f32 %v1875, %v1875
          %v1877 = vsel %vm901, %v1876, 0.0
          %1878 = vadd.xlane.f32.xlu0 %v1877
          %v1879 = vpop.xlane.xlu0 %1878
          %v1880 = vmul.f32 %v1879, %v905
          %v1881 = vadd.f32 %v1880, 1e-06
          %v1882 = vrsqrt.pop %v1881
          %v1883 = vmul.f32 %v1875, %v1882
          %v1885 = vlaneseq
          %v1886 = vshrl.u32 %v1885, 7
          %v1887 = vsub.s32 0, %v1886
          %v1888 = vrot.slane %v1869, %v1887
          %v1890 = vmul.f32 %v1883, %v1888
          %v1892 = vlaneseq
          %v1893 = vshrl.u32 %v1892, 7
          %v1894 = vsub.s32 0, %v1893
          %v1895 = vrot.slane %v1870, %v1894
          %v1897 = vadd.f32 %v1890, %v1895
          %1898 = vst.msk [vmem:[%s829] sm:$0xff] %vm901, %v1897
        $region108: #{tpu_custom_call.1} parent=95 // pred_fallthru
          _
        %s1899 = sand.u32 %s540, 1
        %s1900 = scalar_lea.sflag [#allocation5], %s1899
        %s1901 = sand.u32 %s540, 1
        %s1902 = smul.addr %s1901, 8
        %s1903 = scalar_lea.vmem [#allocation6], %s1902
        // Predicated region
        $region109: #{tpu_custom_call.1} parent=95 // pred_check
          %p1904 = pneg %p550
        $region110: #{tpu_custom_call.1} parent=95 // pred_check_branch
          %1906 = sbr.rel (%p1904) target = $region112
        $region111: #{tpu_custom_call.1} parent=95 // pred_region
          %s1908 = ssub.s32 128, 128
          %1909 = vsyncadd %s1900, %s1908
          %s1910 = smul.addr %s40, 128
          %s1911 = scalar_lea.hbm %s19, %s1910
          %s1913 = sshll.u32 %s1903, 4
          %s1914 = int_to_ptr.vmem [resolvable:$true] %s1913
          %1916 = dma.vmem_to_hbm [thread:$0]  %s1914, 128, %s1911, %s1900
        $region112: #{tpu_custom_call.1} parent=95 // pred_fallthru
          _
      $region96: #{tpu_custom_call.1} parent=5 // pred_fallthru
        _
      %p1917 = scmp.le.s32.totalorder 2, %s31
      // Predicated region
      $region113: #{tpu_custom_call.1} parent=5 // pred_check
        %p1918 = pneg %p1917
      $region114: #{tpu_custom_call.1} parent=5 // pred_check_branch
        %1920 = sbr.rel (%p1918) target = $region116
      $region115: #{tpu_custom_call.1} parent=5 // pred_region
        %s1921 = ssub.s32 %s31, 2
        // Predicated region
        $region117: #{tpu_custom_call.1} parent=115 // pred_check
          %p1922 = pneg %p556
        $region118: #{tpu_custom_call.1} parent=115 // pred_check_branch
          %1924 = sbr.rel (%p1922) target = $region120
        $region119: #{tpu_custom_call.1} parent=115 // pred_region
          %s1925 = sand.u32 %s541, 1
          %s1926 = scalar_lea.sflag [#allocation5], %s1925
          %s1927 = sand.u32 %s541, 1
          %s1928 = smul.addr %s1927, 8
          %s1929 = scalar_lea.vmem [#allocation6], %s1928
          %1930 = dma.done %s1926, 128
        $region120: #{tpu_custom_call.1} parent=115 // pred_fallthru
          _
      $region116: #{tpu_custom_call.1} parent=5 // pred_fallthru
        _
    $region6: #{tpu_custom_call.1} parent=1 // loop_footer
      %s35 = sadd.s32 1, %s31
    $region7: #{tpu_custom_call.1} parent=1 // loop_footer_branch
      %30 = sbr.rel target = $region3
    $region8: #{tpu_custom_call.1} parent=1 // loop_exit
      _
    %1931 = vsyncpa [#allocation4], 1
    %s1932 = scalar_lea.sflag [#allocation4], 1
    %1933 = vsyncpa %s1932, 1
    %1934 = vsyncpa [#allocation5], 1
    %s1935 = scalar_lea.sflag [#allocation5], 1
    %1936 = vsyncpa %s1935, 1

</llo_original>
